<compile_context>
chip_gen: v5e
topology: v5e:2x2
jax: 0.10.0
libtpu: 0.0.40
codegen_flags: <defaults>
</compile_context>

<pallas_src>
import jax
import jax.numpy as jnp
from jax.experimental import pallas as pl
from jax.experimental.pallas import tpu as pltpu


NEG_SLOPE = 0.01   # nn.LeakyReLU default


def _classifier_kernel(x_ref, w1_ref, b1_ref, w2_ref, b2_ref, out_ref, tsne_ref):
    k = pl.program_id(0)

    # Output block index is constant across the grid -> out_ref is resident in
    # VMEM for the whole reduction; initialize it with the broadcast bias.
    @pl.when(k == 0)
    def _():
        out_ref[...] = jnp.broadcast_to(b2_ref[...], out_ref.shape)

    # ---- layer 1 (column tile of hidden): h = x @ W1[:, k-tile] + b1[k-tile] ----
    h = jnp.dot(x_ref[...].astype(jnp.bfloat16), w1_ref[...],
                preferred_element_type=jnp.float32)
    h = h + b1_ref[...]

    # Dropout: identity at inference time.
    # TODO(synk): training-mode dropout (pltpu.prng_random_bits mask) not applied.

    # LeakyReLU
    t = jnp.where(h > 0, h, NEG_SLOPE * h)
    tsne_ref[...] = t.astype(tsne_ref.dtype)

    # ---- layer 2 (reduction over hidden tiles): out += t @ W2[k-tile, :] ----
    out_ref[...] += jnp.dot(t.astype(w2_ref.dtype), w2_ref[...],
                            preferred_element_type=jnp.float32)


def prepare_classifier_params(w1, b1, w2, b2):
    """One-time conversion into the kernel's transfer format.

    Call at parameter-init / load time, NOT per forward call — the bf16 casts
    read/write more bytes than the kernel's own DMA.
    """
    return (w1.astype(jnp.bfloat16),
            b1.reshape(1, -1).astype(jnp.float32),
            w2.astype(jnp.bfloat16),
            b2.reshape(1, -1).astype(jnp.float32))


def label_classifier(x, w1_b, b1_r, w2_b, b2_r, *, tile_n=2048):
    """x: (B, fc_in) f32; weights pre-converted via prepare_classifier_params.

    Returns (logits (B, nclass) f32, tsne (B, hidden) f32).
    """
    B, fc_in = x.shape
    hidden = w1_b.shape[1]
    nclass = w2_b.shape[1]

    tn = min(tile_n, hidden)
    assert hidden % tn == 0, "hidden must be divisible by the tile size"
    grid = (hidden // tn,)

    flops = 2 * B * (fc_in * hidden + hidden * nclass)
    bytes_accessed = (x.size * 4 + w1_b.size * 2 + b1_r.size * 4
                      + w2_b.size * 2 + b2_r.size * 4
                      + B * nclass * 4 + B * hidden * 4)

    out, tsne = pl.pallas_call(
        _classifier_kernel,
        out_shape=(
            jax.ShapeDtypeStruct((B, nclass), jnp.float32),
            jax.ShapeDtypeStruct((B, hidden), jnp.float32),
        ),
        grid_spec=pltpu.PrefetchScalarGridSpec(
            num_scalar_prefetch=0,
            grid=grid,
            in_specs=[
                pl.BlockSpec((B, fc_in), lambda k: (0, 0)),     # x   (resident)
                pl.BlockSpec((fc_in, tn), lambda k: (0, k)),    # W1 column tile
                pl.BlockSpec((1, tn), lambda k: (0, k)),        # b1 tile
                pl.BlockSpec((tn, nclass), lambda k: (k, 0)),   # W2 row tile (un-padded)
                pl.BlockSpec((1, nclass), lambda k: (0, 0)),    # b2  (resident)
            ],
            out_specs=(
                pl.BlockSpec((B, nclass), lambda k: (0, 0)),    # out (accumulated in-place)
                pl.BlockSpec((B, tn), lambda k: (0, k)),        # tsne column tile
            ),
        ),
        compiler_params=pltpu.CompilerParams(
            dimension_semantics=("arbitrary",),
            vmem_limit_bytes=4 << 20,
        ),
        cost_estimate=pl.CostEstimate(
            flops=flops, transcendentals=0, bytes_accessed=bytes_accessed),
    )(x, w1_b, b1_r, w2_b, b2_r)

    return out, tsne


def init_params(key, fc_in_dim, hidden, nclass):
    """Deterministic init mimicking PyTorch nn.Linear default (U[-1/sqrt(fan_in), +])."""
    k1, k2, k3, k4 = jax.random.split(key, 4)
    lim1 = 1.0 / (fc_in_dim ** 0.5)
    lim2 = 1.0 / (hidden ** 0.5)
    w1 = jax.random.uniform(k1, (fc_in_dim, hidden), jnp.float32, -lim1, lim1)
    b1 = jax.random.uniform(k2, (hidden,), jnp.float32, -lim1, lim1)
    w2 = jax.random.uniform(k3, (hidden, nclass), jnp.float32, -lim2, lim2)
    b2 = jax.random.uniform(k4, (nclass,), jnp.float32, -lim2, lim2)
    return w1, b1, w2, b2


if __name__ == "__main__":
    # args.graph_out=8, args.channels_num=4, args.adj_num=2 -> fc_in_dim = 64
    graph_out, channels_num, adj_num = 8, 4, 2
    fc_in_dim = graph_out * channels_num * adj_num
    hidden = 4096            # hardcoded in the module
    nclass = 16
    batch = 8

    key = jax.random.PRNGKey(0)
    kx, kp = jax.random.split(key)
    x = jax.random.normal(kx, (batch, fc_in_dim), jnp.float32)
    w1, b1, w2, b2 = init_params(kp, fc_in_dim, hidden, nclass)

    # One-time conversion (hoisted out of the per-call hot path).
    w1_b, b1_r, w2_b, b2_r = jax.block_until_ready(
        prepare_classifier_params(w1, b1, w2, b2))

    out, tsne = label_classifier(x, w1_b, b1_r, w2_b, b2_r)
    out, tsne = jax.block_until_ready((out, tsne))

    # Reference in plain JAX using the same bf16-weight / f32-accumulate numerics.
    xb = x.astype(jnp.bfloat16)
    h_ref = jnp.dot(xb, w1_b, preferred_element_type=jnp.float32) + b1
    tsne_ref = jnp.where(h_ref > 0, h_ref, NEG_SLOPE * h_ref)
    out_ref = jnp.dot(tsne_ref.astype(jnp.bfloat16), w2_b,
                      preferred_element_type=jnp.float32) + b2

    assert out.shape == (batch, nclass) and tsne.shape == (batch, hidden)
    assert jnp.allclose(tsne, tsne_ref, atol=1e-2, rtol=1e-2), "tsne mismatch"
    assert jnp.allclose(out, out_ref, atol=1e-2, rtol=1e-2), "logits mismatch"

    print("KERNEL_OK")
</pallas_src>

<mosaic_0001>
module attributes {stable_mosaic.version = 11 : i64} {
  func.func @_classifier_kernel(%arg0: i32, %arg1: memref<8x64xf32, #tpu.memory_space<vmem>>, %arg2: memref<64x2048xbf16, #tpu.memory_space<vmem>>, %arg3: memref<1x2048xf32, #tpu.memory_space<vmem>>, %arg4: memref<2048x16xbf16, #tpu.memory_space<vmem>>, %arg5: memref<1x16xf32, #tpu.memory_space<vmem>>, %arg6: memref<8x16xf32, #tpu.memory_space<vmem>>, %arg7: memref<8x2048xf32, #tpu.memory_space<vmem>>) attributes {dimension_semantics = [#tpu.dimension_semantics<arbitrary>], iteration_bounds = array<i64: 2>, scalar_prefetch = 0 : i64, scratch_operands = 0 : i64, tpu.core_type = #tpu.core_type<tc>, window_params = [{pipeline_mode = #tpu.pipeline_mode<synchronous>, transform_indices = @transform_0, window_bounds = array<i64: 8, 64>}, {transform_indices = @transform_1, window_bounds = array<i64: 64, 2048>}, {transform_indices = @transform_2, window_bounds = array<i64: 1, 2048>}, {transform_indices = @transform_3, window_bounds = array<i64: 2048, 16>}, {pipeline_mode = #tpu.pipeline_mode<synchronous>, transform_indices = @transform_4, window_bounds = array<i64: 1, 16>}, {pipeline_mode = #tpu.pipeline_mode<synchronous>, transform_indices = @transform_5, window_bounds = array<i64: 8, 16>}, {transform_indices = @transform_6, window_bounds = array<i64: 8, 2048>}]} {
    %c0_i32 = arith.constant 0 : i32
    %0 = arith.cmpi eq, %arg0, %c0_i32 : i32
    %1 = arith.extui %0 : i1 to i32
    %c0_i32_0 = arith.constant 0 : i32
    %2 = arith.cmpi ne, %1, %c0_i32_0 : i32
    scf.if %2 {
      %c0_17 = arith.constant 0 : index
      %c0_18 = arith.constant 0 : index
      %22 = vector.load %arg5[%c0_17, %c0_18] : memref<1x16xf32, #tpu.memory_space<vmem>>, vector<1x16xf32>
      %23 = vector.shape_cast %22 : vector<1x16xf32> to vector<1x16xf32>
      %24 = vector.broadcast %23 : vector<1x16xf32> to vector<8x16xf32>
      %c0_19 = arith.constant 0 : index
      %c0_20 = arith.constant 0 : index
      %25 = vector.load %arg6[%c0_19, %c0_20] : memref<8x16xf32, #tpu.memory_space<vmem>>, vector<8x16xf32>
      tpu.vector_store %arg6[%c0_19, %c0_20], %24 {strides = array<i32>} : memref<8x16xf32, #tpu.memory_space<vmem>>, vector<8x16xf32>,
    } else {
    }
    %c0 = arith.constant 0 : index
    %c0_1 = arith.constant 0 : index
    %3 = vector.load %arg1[%c0, %c0_1] : memref<8x64xf32, #tpu.memory_space<vmem>>, vector<8x64xf32>
    %4 = arith.truncf %3 : vector<8x64xf32> to vector<8x64xbf16>
    %c0_2 = arith.constant 0 : index
    %c0_3 = arith.constant 0 : index
    %5 = vector.load %arg2[%c0_2, %c0_3] : memref<64x2048xbf16, #tpu.memory_space<vmem>>, vector<64x2048xbf16>
    %cst = arith.constant dense<0.000000e+00> : vector<8x2048xf32>
    %6 = tpu.matmul %4, %5, %cst {dimension_numbers = #tpu.dot_dimension_numbers<[1], [0], [0], [1], [0, 0, 1, 1], [], []>} : vector<8x64xbf16>, vector<64x2048xbf16>, vector<8x2048xf32> -> vector<8x2048xf32>
    %c0_4 = arith.constant 0 : index
    %c0_5 = arith.constant 0 : index
    %7 = vector.load %arg3[%c0_4, %c0_5] : memref<1x2048xf32, #tpu.memory_space<vmem>>, vector<1x2048xf32>
    %8 = vector.broadcast %7 : vector<1x2048xf32> to vector<8x2048xf32>
    %9 = arith.addf %6, %8 : vector<8x2048xf32>
    %cst_6 = arith.constant 0.000000e+00 : f32
    %10 = vector.broadcast %cst_6 : f32 to vector<8x2048xf32>
    %11 = arith.cmpf ogt, %9, %10 : vector<8x2048xf32>
    %cst_7 = arith.constant 0.00999999977 : f32
    %12 = vector.broadcast %cst_7 : f32 to vector<8x2048xf32>
    %13 = arith.mulf %12, %9 : vector<8x2048xf32>
    %14 = arith.select %11, %9, %13 : vector<8x2048xi1>, vector<8x2048xf32>
    %c0_8 = arith.constant 0 : index
    %c0_9 = arith.constant 0 : index
    %15 = vector.load %arg7[%c0_8, %c0_9] : memref<8x2048xf32, #tpu.memory_space<vmem>>, vector<8x2048xf32>
    tpu.vector_store %arg7[%c0_8, %c0_9], %14 {strides = array<i32>} : memref<8x2048xf32, #tpu.memory_space<vmem>>, vector<8x2048xf32>,
    %c0_10 = arith.constant 0 : index
    %c0_11 = arith.constant 0 : index
    %16 = vector.load %arg6[%c0_10, %c0_11] : memref<8x16xf32, #tpu.memory_space<vmem>>, vector<8x16xf32>
    %17 = arith.truncf %14 : vector<8x2048xf32> to vector<8x2048xbf16>
    %c0_12 = arith.constant 0 : index
    %c0_13 = arith.constant 0 : index
    %18 = vector.load %arg4[%c0_12, %c0_13] : memref<2048x16xbf16, #tpu.memory_space<vmem>>, vector<2048x16xbf16>
    %cst_14 = arith.constant dense<0.000000e+00> : vector<8x16xf32>
    %19 = tpu.matmul %17, %18, %cst_14 {dimension_numbers = #tpu.dot_dimension_numbers<[1], [0], [0], [1], [0, 0, 1, 1], [], []>} : vector<8x2048xbf16>, vector<2048x16xbf16>, vector<8x16xf32> -> vector<8x16xf32>
    %20 = arith.addf %16, %19 : vector<8x16xf32>
    %c0_15 = arith.constant 0 : index
    %c0_16 = arith.constant 0 : index
    %21 = vector.load %arg6[%c0_15, %c0_16] : memref<8x16xf32, #tpu.memory_space<vmem>>, vector<8x16xf32>
    tpu.vector_store %arg6[%c0_15, %c0_16], %20 {strides = array<i32>} : memref<8x16xf32, #tpu.memory_space<vmem>>, vector<8x16xf32>,
    return
  }
  func.func @transform_0(%arg0: i32) -> (i32, i32) {
    %c0_i32 = arith.constant 0 : i32
    %c0_i32_0 = arith.constant 0 : i32
    %c0_i32_1 = arith.constant 0 : i32
    return %c0_i32, %c0_i32_0 : i32, i32
  }
  func.func @transform_1(%arg0: i32) -> (i32, i32) {
    %c0_i32 = arith.constant 0 : i32
    %c0_i32_0 = arith.constant 0 : i32
    return %c0_i32, %arg0 : i32, i32
  }
  func.func @transform_2(%arg0: i32) -> (i32, i32) {
    %c0_i32 = arith.constant 0 : i32
    %c0_i32_0 = arith.constant 0 : i32
    return %c0_i32, %arg0 : i32, i32
  }
  func.func @transform_3(%arg0: i32) -> (i32, i32) {
    %c0_i32 = arith.constant 0 : i32
    %c0_i32_0 = arith.constant 0 : i32
    return %arg0, %c0_i32 : i32, i32
  }
  func.func @transform_4(%arg0: i32) -> (i32, i32) {
    %c0_i32 = arith.constant 0 : i32
    %c0_i32_0 = arith.constant 0 : i32
    %c0_i32_1 = arith.constant 0 : i32
    return %c0_i32, %c0_i32_0 : i32, i32
  }
  func.func @transform_5(%arg0: i32) -> (i32, i32) {
    %c0_i32 = arith.constant 0 : i32
    %c0_i32_0 = arith.constant 0 : i32
    %c0_i32_1 = arith.constant 0 : i32
    return %c0_i32, %c0_i32_0 : i32, i32
  }
  func.func @transform_6(%arg0: i32) -> (i32, i32) {
    %c0_i32 = arith.constant 0 : i32
    %c0_i32_0 = arith.constant 0 : i32
    return %c0_i32, %arg0 : i32, i32
  }
}

</mosaic_0001>

<llo_original>
// kernel: tpu_custom_call.1
$region0: #{tpu_custom_call.1}
  #allocation0 [shape = 'u32[]', space=smem, size = 0x4, offset = 0x4, fixed_abs, tag = 'smem constant byte address 0x4 - core index']
  #allocation1 [shape = 'u32[72,128]{1,0:T(1,128)}', space=vmem, size = 0x9000, scoped, tag = 'internal scratch']
  %s0 = inlined_call_operand.vmem [shape: f32[8,64], index: 0, kind: input, shape index: {}]
  %s1 = inlined_call_operand.vmem [shape: bf16[64,4096], index: 1, kind: input, shape index: {}]
  %s2 = inlined_call_operand.vmem [shape: f32[1,4096], index: 2, kind: input, shape index: {}]
  %s3 = inlined_call_operand.vmem [shape: bf16[4096,16], index: 3, kind: input, shape index: {}]
  %s4 = inlined_call_operand.vmem [shape: f32[1,16], index: 4, kind: input, shape index: {}]
  %s5 = inlined_call_operand.hbm [shape: f32[8,16], index: 5, kind: output, shape index: {0}]
  %s6 = inlined_call_operand.hbm [shape: f32[8,4096], index: 6, kind: output, shape index: {1}]
  %7 = xla_tuple %s5, %s6
  %s8 = sld [smem:[#allocation0]]
  $region88: #{tpu_custom_call.1} parent=0
    _
  %s10 = ssub.s32 1, %s8
  %s11 = scalar_select 0, %s10, %s8
  $region1: #{tpu_custom_call.1} parent=0
    #allocation2 [shape = 'u8[524288]{0}', space=vmem, size = 0x80000, scoped, tag = 'input window, operand 1']
    #allocation3 [shape = 'u8[4096]{0}', space=vmem, size = 0x1000, scoped, tag = 'output window, operand 0, single buffered']
    #allocation4 [shape = 's32[2]{0}', space=sflag, size = 0x8, scoped, tag = 'scoped memory for tpu_custom_call.1']
    #allocation5 [shape = 'u8[131072]{0}', space=vmem, size = 0x20000, scoped, tag = 'output window, operand 1']
    #allocation6 [shape = 's32[2]{0}', space=sflag, size = 0x8, scoped, tag = 'scoped memory for tpu_custom_call.1']
    %12 = vsyncpa [#allocation4], 0
    %13 = vsyncpa [#allocation6], 0
    %s14 = scalar_lea.sflag [#allocation6], 1
    %15 = vsyncpa %s14, 0
    loop: start=0, step=1, limit=4
    $region2: #{tpu_custom_call.1} parent=1 // loop_pre_header
      _
    $region3: #{tpu_custom_call.1} parent=1 // loop_header
      %s17 = sphi 0, %s21
      %p18 = scmp.ge.s32.totalorder %s17, 4
      %s25 = sphi 0, %s25
      %s27 = sphi 0, %s25
      %s28 = sphi 0, %s27
      %s42 = sphi 0, %s28
      %s48 = sphi 0, %s50
      %s51 = sphi 0, %s48
      %s52 = sphi 0, %s51
      %s68 = sphi 0, %s52
      %s74 = sphi 0, %s76
      %s77 = sphi 0, %s74
      %s78 = sphi 0, %s77
      %s94 = sphi 0, %s78
      %s100 = sphi 0, %s102
      %s103 = sphi 0, %s100
      %s104 = sphi 0, %s103
      %s120 = sphi 0, %s104
      %s124 = sphi 0, %s124
      %s126 = sphi 0, %s124
      %s127 = sphi 0, %s126
      %s141 = sphi 0, %s127
      %s145 = sphi 0, %s145
      %s147 = sphi 0, %s145
      %s148 = sphi 0, %s147
      %s162 = sphi 0, %s148
      %s168 = sphi 0, %s170
      %s171 = sphi 0, %s168
      %s172 = sphi 0, %s171
      %s188 = sphi 0, %s172
    $region4: #{tpu_custom_call.1} parent=1 // loop_header_branch
      %20 = sbr.rel (%p18) target = $region8
    $region5: #{tpu_custom_call.1} parent=1 // loop_body
      %s22 = ssub.s32 %s17, 1
      %s23 = ssub.s32 %s17, 2
      %s24 = sadd.s32 %s17, 1
      %s26 = sadd.s32 %s25, 1
      %p29 = scmp.eq.s32.totalorder %s17, 1
      %p30 = scmp.ne.s32.totalorder %s25, %s27
      %p31 = scmp.eq.s32.totalorder %s17, 0
      %p32 = por %p30, %p31
      %p33 = scmp.ne.s32.totalorder %s25, %s27
      %p34 = scmp.eq.s32.totalorder %s22, 1
      %p35 = por %p33, %p34
      %p36 = scmp.ne.s32.totalorder %s27, %s28
      %p37 = scmp.eq.s32.totalorder %s22, 0
      %p38 = por %p36, %p37
      %p39 = scmp.ne.s32.totalorder %s27, %s28
      %p40 = scmp.eq.s32.totalorder %s23, 1
      %p41 = por %p39, %p40
      %p43 = scmp.ne.s32.totalorder %s28, %s42
      %p44 = scmp.eq.s32.totalorder %s23, 0
      %p45 = por %p43, %p44
      %s46 = ssub.s32 %s17, %s24
      %p47 = scmp.eq.s32.totalorder %s46, 0
      %s49 = sadd.s32 %s48, 1
      %s50 = scalar_select %p47, %s48, %s49
      %p53 = pneg %p47
      %p54 = scmp.eq.s32.totalorder %s17, 1
      %p55 = por %p53, %p54
      %p56 = scmp.ne.s32.totalorder %s48, %s51
      %p57 = scmp.eq.s32.totalorder %s17, 0
      %p58 = por %p56, %p57
      %p59 = scmp.ne.s32.totalorder %s48, %s51
      %p60 = scmp.eq.s32.totalorder %s22, 1
      %p61 = por %p59, %p60
      %p62 = scmp.ne.s32.totalorder %s51, %s52
      %p63 = scmp.eq.s32.totalorder %s22, 0
      %p64 = por %p62, %p63
      %p65 = scmp.ne.s32.totalorder %s51, %s52
      %p66 = scmp.eq.s32.totalorder %s23, 1
      %p67 = por %p65, %p66
      %p69 = scmp.ne.s32.totalorder %s52, %s68
      %p70 = scmp.eq.s32.totalorder %s23, 0
      %p71 = por %p69, %p70
      %s72 = ssub.s32 %s17, %s24
      %p73 = scmp.eq.s32.totalorder %s72, 0
      %s75 = sadd.s32 %s74, 1
      %s76 = scalar_select %p73, %s74, %s75
      %p79 = pneg %p73
      %p80 = scmp.eq.s32.totalorder %s17, 1
      %p81 = por %p79, %p80
      %p82 = scmp.ne.s32.totalorder %s74, %s77
      %p83 = scmp.eq.s32.totalorder %s17, 0
      %p84 = por %p82, %p83
      %p85 = scmp.ne.s32.totalorder %s74, %s77
      %p86 = scmp.eq.s32.totalorder %s22, 1
      %p87 = por %p85, %p86
      %p88 = scmp.ne.s32.totalorder %s77, %s78
      %p89 = scmp.eq.s32.totalorder %s22, 0
      %p90 = por %p88, %p89
      %p91 = scmp.ne.s32.totalorder %s77, %s78
      %p92 = scmp.eq.s32.totalorder %s23, 1
      %p93 = por %p91, %p92
      %p95 = scmp.ne.s32.totalorder %s78, %s94
      %p96 = scmp.eq.s32.totalorder %s23, 0
      %p97 = por %p95, %p96
      %s98 = ssub.s32 %s17, %s24
      %p99 = scmp.eq.s32.totalorder %s98, 0
      %s101 = sadd.s32 %s100, 1
      %s102 = scalar_select %p99, %s100, %s101
      %p105 = pneg %p99
      %p106 = scmp.eq.s32.totalorder %s17, 1
      %p107 = por %p105, %p106
      %p108 = scmp.ne.s32.totalorder %s100, %s103
      %p109 = scmp.eq.s32.totalorder %s17, 0
      %p110 = por %p108, %p109
      %p111 = scmp.ne.s32.totalorder %s100, %s103
      %p112 = scmp.eq.s32.totalorder %s22, 1
      %p113 = por %p111, %p112
      %p114 = scmp.ne.s32.totalorder %s103, %s104
      %p115 = scmp.eq.s32.totalorder %s22, 0
      %p116 = por %p114, %p115
      %p117 = scmp.ne.s32.totalorder %s103, %s104
      %p118 = scmp.eq.s32.totalorder %s23, 1
      %p119 = por %p117, %p118
      %p121 = scmp.ne.s32.totalorder %s104, %s120
      %p122 = scmp.eq.s32.totalorder %s23, 0
      %p123 = por %p121, %p122
      %s125 = sadd.s32 %s124, 1
      %p128 = scmp.eq.s32.totalorder %s17, 1
      %p129 = scmp.ne.s32.totalorder %s124, %s126
      %p130 = scmp.eq.s32.totalorder %s17, 0
      %p131 = por %p129, %p130
      %p132 = scmp.ne.s32.totalorder %s124, %s126
      %p133 = scmp.eq.s32.totalorder %s22, 1
      %p134 = por %p132, %p133
      %p135 = scmp.ne.s32.totalorder %s126, %s127
      %p136 = scmp.eq.s32.totalorder %s22, 0
      %p137 = por %p135, %p136
      %p138 = scmp.ne.s32.totalorder %s126, %s127
      %p139 = scmp.eq.s32.totalorder %s23, 1
      %p140 = por %p138, %p139
      %p142 = scmp.ne.s32.totalorder %s127, %s141
      %p143 = scmp.eq.s32.totalorder %s23, 0
      %p144 = por %p142, %p143
      %s146 = sadd.s32 %s145, 1
      %p149 = scmp.eq.s32.totalorder %s17, 1
      %p150 = scmp.ne.s32.totalorder %s145, %s147
      %p151 = scmp.eq.s32.totalorder %s17, 0
      %p152 = por %p150, %p151
      %p153 = scmp.ne.s32.totalorder %s145, %s147
      %p154 = scmp.eq.s32.totalorder %s22, 1
      %p155 = por %p153, %p154
      %p156 = scmp.ne.s32.totalorder %s147, %s148
      %p157 = scmp.eq.s32.totalorder %s22, 0
      %p158 = por %p156, %p157
      %p159 = scmp.ne.s32.totalorder %s147, %s148
      %p160 = scmp.eq.s32.totalorder %s23, 1
      %p161 = por %p159, %p160
      %p163 = scmp.ne.s32.totalorder %s148, %s162
      %p164 = scmp.eq.s32.totalorder %s23, 0
      %p165 = por %p163, %p164
      %s166 = ssub.s32 %s17, %s24
      %p167 = scmp.eq.s32.totalorder %s166, 0
      %s169 = sadd.s32 %s168, 1
      %s170 = scalar_select %p167, %s168, %s169
      %p173 = pneg %p167
      %p174 = scmp.eq.s32.totalorder %s17, 1
      %p175 = por %p173, %p174
      %p176 = scmp.ne.s32.totalorder %s168, %s171
      %p177 = scmp.eq.s32.totalorder %s17, 0
      %p178 = por %p176, %p177
      %p179 = scmp.ne.s32.totalorder %s168, %s171
      %p180 = scmp.eq.s32.totalorder %s22, 1
      %p181 = por %p179, %p180
      %p182 = scmp.ne.s32.totalorder %s171, %s172
      %p183 = scmp.eq.s32.totalorder %s22, 0
      %p184 = por %p182, %p183
      %p185 = scmp.ne.s32.totalorder %s171, %s172
      %p186 = scmp.eq.s32.totalorder %s23, 1
      %p187 = por %p185, %p186
      %p189 = scmp.ne.s32.totalorder %s172, %s188
      %p190 = scmp.eq.s32.totalorder %s23, 0
      %p191 = por %p189, %p190
      %p192 = scmp.le.s32.totalorder 1, %s17
      %p193 = scmp.lt.s32.totalorder %s17, 3
      %p194 = pnand %p192, %p193
      %p195 = pneg %p194
      // Predicated region
      $region9: #{tpu_custom_call.1} parent=5 // pred_check
        _
      $region10: #{tpu_custom_call.1} parent=5 // pred_check_branch
        %197 = sbr.rel (%p194) target = $region12
      $region11: #{tpu_custom_call.1} parent=5 // pred_region
        %s198 = ssub.s32 %s17, 1
        // Predicated region
        $region13: #{tpu_custom_call.1} parent=11 // pred_check
          %p199 = pneg %p38
        $region14: #{tpu_custom_call.1} parent=11 // pred_check_branch
          %201 = sbr.rel (%p199) target = $region16
        $region15: #{tpu_custom_call.1} parent=11 // pred_region
          _
        $region16: #{tpu_custom_call.1} parent=11 // pred_fallthru
          _
        // Predicated region
        $region17: #{tpu_custom_call.1} parent=11 // pred_check
          %p202 = pneg %p137
        $region18: #{tpu_custom_call.1} parent=11 // pred_check_branch
          %204 = sbr.rel (%p202) target = $region20
        $region19: #{tpu_custom_call.1} parent=11 // pred_region
          _
        $region20: #{tpu_custom_call.1} parent=11 // pred_fallthru
          _
      $region12: #{tpu_custom_call.1} parent=5 // pred_fallthru
        _
      %p205 = scmp.lt.s32.totalorder %s17, 2
      // Predicated region
      $region21: #{tpu_custom_call.1} parent=5 // pred_check
        %p206 = pneg %p205
      $region22: #{tpu_custom_call.1} parent=5 // pred_check_branch
        %208 = sbr.rel (%p206) target = $region24
      $region23: #{tpu_custom_call.1} parent=5 // pred_region
        // Predicated region
        $region25: #{tpu_custom_call.1} parent=23 // pred_check
          %p209 = pneg %p58
        $region26: #{tpu_custom_call.1} parent=23 // pred_check_branch
          %211 = sbr.rel (%p209) target = $region28
        $region27: #{tpu_custom_call.1} parent=23 // pred_region
          %s212 = sand.u32 %s48, 1
          %s213 = sand.u32 %s48, 1
          %s214 = smul.addr %s213, 512
          %s215 = scalar_lea.vmem [#allocation2], %s214
          %s216 = smul.u32 16, %s17
          %s217 = smul.addr %s216, 4
          %s218 = scalar_lea.vmem %s1, %s217
          // Predicated region
          $region29: #{tpu_custom_call.1} parent=27 // pred_check
            _
          $region30: #{tpu_custom_call.1} parent=27 // pred_check_branch
            %220 = sbr.rel (0) target = $region32
          $region31: #{tpu_custom_call.1} parent=27 // pred_region
            // Predicated region
            $region33: #{tpu_custom_call.1} parent=31 // pred_check
              _
            $region34: #{tpu_custom_call.1} parent=31 // pred_check_branch
              %222 = sbr.rel (0) target = $region36
            $region35: #{tpu_custom_call.1} parent=31 // pred_region
              loop: start=0, step=1, limit=1
              $region37: #{tpu_custom_call.1} parent=35 // loop_pre_header
                _
              $region38: #{tpu_custom_call.1} parent=35 // loop_header
                %s224 = sphi 0, %s228
                %p225 = scmp.ge.s32.totalorder %s224, 1
                %s229 = sphi %s218, %s218
                %s230 = sphi %s215, %s215
              $region39: #{tpu_custom_call.1} parent=35 // loop_header_branch
                %227 = sbr.rel (%p225) target = $region43
              $region40: #{tpu_custom_call.1} parent=35 // loop_body
                %v231 = vld [vmem:[%s229] sm:$0xff]
                %232 = vst [vmem:[%s230] sm:$0xff] %v231
                %v233 = vld [vmem:[%s229 + $0x8] sm:$0xff]
                %234 = vst [vmem:[%s230 + $0x8] sm:$0xff] %v233
                %v235 = vld [vmem:[%s229 + $0x10] sm:$0xff]
                %236 = vst [vmem:[%s230 + $0x10] sm:$0xff] %v235
                %v237 = vld [vmem:[%s229 + $0x18] sm:$0xff]
                %238 = vst [vmem:[%s230 + $0x18] sm:$0xff] %v237
                %v239 = vld [vmem:[%s229 + $0x20] sm:$0xff]
                %240 = vst [vmem:[%s230 + $0x20] sm:$0xff] %v239
                %v241 = vld [vmem:[%s229 + $0x28] sm:$0xff]
                %242 = vst [vmem:[%s230 + $0x28] sm:$0xff] %v241
                %v243 = vld [vmem:[%s229 + $0x30] sm:$0xff]
                %244 = vst [vmem:[%s230 + $0x30] sm:$0xff] %v243
                %v245 = vld [vmem:[%s229 + $0x38] sm:$0xff]
                %246 = vst [vmem:[%s230 + $0x38] sm:$0xff] %v245
                %v247 = vld [vmem:[%s229 + $0x80] sm:$0xff]
                %248 = vst [vmem:[%s230 + $0x40] sm:$0xff] %v247
                %v249 = vld [vmem:[%s229 + $0x88] sm:$0xff]
                %250 = vst [vmem:[%s230 + $0x48] sm:$0xff] %v249
                %v251 = vld [vmem:[%s229 + $0x90] sm:$0xff]
                %252 = vst [vmem:[%s230 + $0x50] sm:$0xff] %v251
                %v253 = vld [vmem:[%s229 + $0x98] sm:$0xff]
                %254 = vst [vmem:[%s230 + $0x58] sm:$0xff] %v253
                %v255 = vld [vmem:[%s229 + $0xa0] sm:$0xff]
                %256 = vst [vmem:[%s230 + $0x60] sm:$0xff] %v255
                %v257 = vld [vmem:[%s229 + $0xa8] sm:$0xff]
                %258 = vst [vmem:[%s230 + $0x68] sm:$0xff] %v257
                %v259 = vld [vmem:[%s229 + $0xb0] sm:$0xff]
                %260 = vst [vmem:[%s230 + $0x70] sm:$0xff] %v259
                %v261 = vld [vmem:[%s229 + $0xb8] sm:$0xff]
                %262 = vst [vmem:[%s230 + $0x78] sm:$0xff] %v261
                %v263 = vld [vmem:[%s229 + $0x100] sm:$0xff]
                %264 = vst [vmem:[%s230 + $0x80] sm:$0xff] %v263
                %v265 = vld [vmem:[%s229 + $0x108] sm:$0xff]
                %266 = vst [vmem:[%s230 + $0x88] sm:$0xff] %v265
                %v267 = vld [vmem:[%s229 + $0x110] sm:$0xff]
                %268 = vst [vmem:[%s230 + $0x90] sm:$0xff] %v267
                %v269 = vld [vmem:[%s229 + $0x118] sm:$0xff]
                %270 = vst [vmem:[%s230 + $0x98] sm:$0xff] %v269
                %v271 = vld [vmem:[%s229 + $0x120] sm:$0xff]
                %272 = vst [vmem:[%s230 + $0xa0] sm:$0xff] %v271
                %v273 = vld [vmem:[%s229 + $0x128] sm:$0xff]
                %274 = vst [vmem:[%s230 + $0xa8] sm:$0xff] %v273
                %v275 = vld [vmem:[%s229 + $0x130] sm:$0xff]
                %276 = vst [vmem:[%s230 + $0xb0] sm:$0xff] %v275
                %v277 = vld [vmem:[%s229 + $0x138] sm:$0xff]
                %278 = vst [vmem:[%s230 + $0xb8] sm:$0xff] %v277
                %v279 = vld [vmem:[%s229 + $0x180] sm:$0xff]
                %280 = vst [vmem:[%s230 + $0xc0] sm:$0xff] %v279
                %v281 = vld [vmem:[%s229 + $0x188] sm:$0xff]
                %282 = vst [vmem:[%s230 + $0xc8] sm:$0xff] %v281
                %v283 = vld [vmem:[%s229 + $0x190] sm:$0xff]
                %284 = vst [vmem:[%s230 + $0xd0] sm:$0xff] %v283
                %v285 = vld [vmem:[%s229 + $0x198] sm:$0xff]
                %286 = vst [vmem:[%s230 + $0xd8] sm:$0xff] %v285
                %v287 = vld [vmem:[%s229 + $0x1a0] sm:$0xff]
                %288 = vst [vmem:[%s230 + $0xe0] sm:$0xff] %v287
                %v289 = vld [vmem:[%s229 + $0x1a8] sm:$0xff]
                %290 = vst [vmem:[%s230 + $0xe8] sm:$0xff] %v289
                %v291 = vld [vmem:[%s229 + $0x1b0] sm:$0xff]
                %292 = vst [vmem:[%s230 + $0xf0] sm:$0xff] %v291
                %v293 = vld [vmem:[%s229 + $0x1b8] sm:$0xff]
                %294 = vst [vmem:[%s230 + $0xf8] sm:$0xff] %v293
                %v295 = vld [vmem:[%s229 + $0x200] sm:$0xff]
                %296 = vst [vmem:[%s230 + $0x100] sm:$0xff] %v295
                %v297 = vld [vmem:[%s229 + $0x208] sm:$0xff]
                %298 = vst [vmem:[%s230 + $0x108] sm:$0xff] %v297
                %v299 = vld [vmem:[%s229 + $0x210] sm:$0xff]
                %300 = vst [vmem:[%s230 + $0x110] sm:$0xff] %v299
                %v301 = vld [vmem:[%s229 + $0x218] sm:$0xff]
                %302 = vst [vmem:[%s230 + $0x118] sm:$0xff] %v301
                %v303 = vld [vmem:[%s229 + $0x220] sm:$0xff]
                %304 = vst [vmem:[%s230 + $0x120] sm:$0xff] %v303
                %v305 = vld [vmem:[%s229 + $0x228] sm:$0xff]
                %306 = vst [vmem:[%s230 + $0x128] sm:$0xff] %v305
                %v307 = vld [vmem:[%s229 + $0x230] sm:$0xff]
                %308 = vst [vmem:[%s230 + $0x130] sm:$0xff] %v307
                %v309 = vld [vmem:[%s229 + $0x238] sm:$0xff]
                %310 = vst [vmem:[%s230 + $0x138] sm:$0xff] %v309
                %v311 = vld [vmem:[%s229 + $0x280] sm:$0xff]
                %312 = vst [vmem:[%s230 + $0x140] sm:$0xff] %v311
                %v313 = vld [vmem:[%s229 + $0x288] sm:$0xff]
                %314 = vst [vmem:[%s230 + $0x148] sm:$0xff] %v313
                %v315 = vld [vmem:[%s229 + $0x290] sm:$0xff]
                %316 = vst [vmem:[%s230 + $0x150] sm:$0xff] %v315
                %v317 = vld [vmem:[%s229 + $0x298] sm:$0xff]
                %318 = vst [vmem:[%s230 + $0x158] sm:$0xff] %v317
                %v319 = vld [vmem:[%s229 + $0x2a0] sm:$0xff]
                %320 = vst [vmem:[%s230 + $0x160] sm:$0xff] %v319
                %v321 = vld [vmem:[%s229 + $0x2a8] sm:$0xff]
                %322 = vst [vmem:[%s230 + $0x168] sm:$0xff] %v321
                %v323 = vld [vmem:[%s229 + $0x2b0] sm:$0xff]
                %324 = vst [vmem:[%s230 + $0x170] sm:$0xff] %v323
                %v325 = vld [vmem:[%s229 + $0x2b8] sm:$0xff]
                %326 = vst [vmem:[%s230 + $0x178] sm:$0xff] %v325
                %v327 = vld [vmem:[%s229 + $0x300] sm:$0xff]
                %328 = vst [vmem:[%s230 + $0x180] sm:$0xff] %v327
                %v329 = vld [vmem:[%s229 + $0x308] sm:$0xff]
                %330 = vst [vmem:[%s230 + $0x188] sm:$0xff] %v329
                %v331 = vld [vmem:[%s229 + $0x310] sm:$0xff]
                %332 = vst [vmem:[%s230 + $0x190] sm:$0xff] %v331
                %v333 = vld [vmem:[%s229 + $0x318] sm:$0xff]
                %334 = vst [vmem:[%s230 + $0x198] sm:$0xff] %v333
                %v335 = vld [vmem:[%s229 + $0x320] sm:$0xff]
                %336 = vst [vmem:[%s230 + $0x1a0] sm:$0xff] %v335
                %v337 = vld [vmem:[%s229 + $0x328] sm:$0xff]
                %338 = vst [vmem:[%s230 + $0x1a8] sm:$0xff] %v337
                %v339 = vld [vmem:[%s229 + $0x330] sm:$0xff]
                %340 = vst [vmem:[%s230 + $0x1b0] sm:$0xff] %v339
                %v341 = vld [vmem:[%s229 + $0x338] sm:$0xff]
                %342 = vst [vmem:[%s230 + $0x1b8] sm:$0xff] %v341
                %v343 = vld [vmem:[%s229 + $0x380] sm:$0xff]
                %344 = vst [vmem:[%s230 + $0x1c0] sm:$0xff] %v343
                %v345 = vld [vmem:[%s229 + $0x388] sm:$0xff]
                %346 = vst [vmem:[%s230 + $0x1c8] sm:$0xff] %v345
                %v347 = vld [vmem:[%s229 + $0x390] sm:$0xff]
                %348 = vst [vmem:[%s230 + $0x1d0] sm:$0xff] %v347
                %v349 = vld [vmem:[%s229 + $0x398] sm:$0xff]
                %350 = vst [vmem:[%s230 + $0x1d8] sm:$0xff] %v349
                %v351 = vld [vmem:[%s229 + $0x3a0] sm:$0xff]
                %352 = vst [vmem:[%s230 + $0x1e0] sm:$0xff] %v351
                %v353 = vld [vmem:[%s229 + $0x3a8] sm:$0xff]
                %354 = vst [vmem:[%s230 + $0x1e8] sm:$0xff] %v353
                %v355 = vld [vmem:[%s229 + $0x3b0] sm:$0xff]
                %356 = vst [vmem:[%s230 + $0x1f0] sm:$0xff] %v355
                %v357 = vld [vmem:[%s229 + $0x3b8] sm:$0xff]
                %358 = vst [vmem:[%s230 + $0x1f8] sm:$0xff] %v357
              $region41: #{tpu_custom_call.1} parent=35 // loop_footer
                %s228 = sadd.s32 1, %s224
              $region42: #{tpu_custom_call.1} parent=35 // loop_footer_branch
                %223 = sbr.rel target = $region38
              $region43: #{tpu_custom_call.1} parent=35 // loop_exit
                _
            $region36: #{tpu_custom_call.1} parent=31 // pred_fallthru
              _
            // Predicated region
            $region44: #{tpu_custom_call.1} parent=31 // pred_check
              _
            $region45: #{tpu_custom_call.1} parent=31 // pred_check_branch
              %360 = sbr.rel target = $region47
            $region46: #{tpu_custom_call.1} parent=31 // pred_region
              _
            $region47: #{tpu_custom_call.1} parent=31 // pred_fallthru
              _
          $region32: #{tpu_custom_call.1} parent=27 // pred_fallthru
            _
          %361 = vnop
        $region28: #{tpu_custom_call.1} parent=23 // pred_fallthru
          _
        // Predicated region
        $region48: #{tpu_custom_call.1} parent=23 // pred_check
          %p362 = pneg %p84
        $region49: #{tpu_custom_call.1} parent=23 // pred_check_branch
          %364 = sbr.rel (%p362) target = $region51
        $region50: #{tpu_custom_call.1} parent=23 // pred_region
          %s365 = smul.u32 16, %s17
          %p366 = scmp.lt.s32.totalorder %s365, 31
          %s367 = scalar_select %p366, %s365, 31
          %s368 = scalar_lea.vmem %s2, %s367
          %s369 = smul.u32 16, %s17
        $region51: #{tpu_custom_call.1} parent=23 // pred_fallthru
          _
        // Predicated region
        $region52: #{tpu_custom_call.1} parent=23 // pred_check
          %p370 = pneg %p110
        $region53: #{tpu_custom_call.1} parent=23 // pred_check_branch
          %372 = sbr.rel (%p370) target = $region55
        $region54: #{tpu_custom_call.1} parent=23 // pred_region
          %s373 = smul.u32 256, %s17
          %p374 = scmp.lt.s32.totalorder %s373, 511
          %s375 = scalar_select %p374, %s373, 511
          %s376 = smul.addr %s375, 4
          %s377 = scalar_lea.vmem %s3, %s376
          %s378 = smul.u32 256, %s17
        $region55: #{tpu_custom_call.1} parent=23 // pred_fallthru
          _
      $region24: #{tpu_custom_call.1} parent=5 // pred_fallthru
        _
      %p379 = scmp.le.s32.totalorder 1, %s17
      %p380 = scmp.lt.s32.totalorder %s17, 3
      %p381 = pnand %p379, %p380
      %p382 = pneg %p381
      // Predicated region
      $region56: #{tpu_custom_call.1} parent=5 // pred_check
        _
      $region57: #{tpu_custom_call.1} parent=5 // pred_check_branch
        %384 = sbr.rel (%p381) target = $region59
      $region58: #{tpu_custom_call.1} parent=5 // pred_region
        %s385 = ssub.s32 %s17, 1
        %s386 = sand.u32 %s51, 1
        %s387 = sand.u32 %s51, 1
        %s388 = smul.addr %s387, 512
        %s389 = scalar_lea.vmem [#allocation2], %s388
        // Predicated region
        $region60: #{tpu_custom_call.1} parent=58 // pred_check
          %p390 = pneg %p64
        $region61: #{tpu_custom_call.1} parent=58 // pred_check_branch
          %392 = sbr.rel (%p390) target = $region63
        $region62: #{tpu_custom_call.1} parent=58 // pred_region
          _
        $region63: #{tpu_custom_call.1} parent=58 // pred_fallthru
          _
        %p393 = pneg %p38
        %p394 = pneg %p35
        %s395 = sand.u32 %s51, 1
        %s396 = sand.u32 %s51, 1
        %s397 = smul.addr %s396, 512
        %s398 = scalar_lea.vmem [#allocation2], %s397
        %p399 = pneg %p64
        %p400 = pneg %p61
        %s401 = smul.u32 16, %s22
        %p402 = scmp.lt.s32.totalorder %s401, 31
        %s403 = scalar_select %p402, %s401, 31
        %s404 = scalar_lea.vmem %s2, %s403
        %p405 = pneg %p90
        %p406 = pneg %p87
        %s407 = smul.u32 256, %s22
        %p408 = scmp.lt.s32.totalorder %s407, 511
        %s409 = scalar_select %p408, %s407, 511
        %s410 = smul.addr %s409, 4
        %s411 = scalar_lea.vmem %s3, %s410
        %p412 = pneg %p116
        %p413 = pneg %p113
        %p414 = pneg %p137
        %p415 = pneg %p134
        %p416 = pneg %p158
        %p417 = pneg %p155
        %p418 = pneg %p184
        %p419 = pneg %p181
        %s420 = sand.u32 %s171, 1
        %s421 = scalar_lea.sflag [#allocation6], %s420
        %s422 = sand.u32 %s171, 1
        %s423 = smul.addr %s422, 128
        %s424 = scalar_lea.vmem [#allocation5], %s423
        %s425 = smul.u32 16, %s22
        %s426 = smul.u32 16, %s22
        %p427 = scmp.lt.s32.totalorder %s426, 31
        %s428 = scalar_select %p427, %s426, 31
        %s429 = scalar_lea.vmem %s2, %s428
        %s430 = smul.u32 16, %s22
        %s431 = smul.u32 256, %s22
        %p432 = scmp.lt.s32.totalorder %s431, 511
        %s433 = scalar_select %p432, %s431, 511
        %s434 = smul.addr %s433, 4
        %s435 = scalar_lea.vmem %s3, %s434
        %s436 = smul.u32 256, %s22
        %s437 = smul.u32 16, %s22
        %p439 = scmp.eq.s32.totalorder %s22, 0
        // Predicated region
        $region64: #{tpu_custom_call.1} parent=58 // pred_check
          %p440 = pneg %p439
        $region65: #{tpu_custom_call.1} parent=58 // pred_check_branch
          %442 = sbr.rel (%p440) target = $region67
        $region66: #{tpu_custom_call.1} parent=58 // pred_region
          %v443 = vld [vmem:[%s4] sm:$0x1]
          %v445 = vperm.slane %v443, 0
          %vm447 = vcmask 130048
          %448 = vst.msk [vmem:[#allocation3] sm:$0xff] %vm447, %v445
        $region67: #{tpu_custom_call.1} parent=58 // pred_fallthru
          _
        %v449 = vld [vmem:[%s0] sm:$0xff]
        %v450 = vpack.c.bf16 %v449, %v449
        %v451 = vld [vmem:[%s389] sm:$0xff]
        %v452 = vld [vmem:[%s389 + $0x8] sm:$0xff]
        %v453 = vld [vmem:[%s389 + $0x10] sm:$0xff]
        %v454 = vld [vmem:[%s389 + $0x18] sm:$0xff]
        %v455 = vld [vmem:[%s389 + $0x20] sm:$0xff]
        %v456 = vld [vmem:[%s389 + $0x28] sm:$0xff]
        %v457 = vld [vmem:[%s389 + $0x30] sm:$0xff]
        %v458 = vld [vmem:[%s389 + $0x38] sm:$0xff]
        %v459 = vld [vmem:[%s389 + $0x40] sm:$0xff]
        %v460 = vld [vmem:[%s389 + $0x48] sm:$0xff]
        %v461 = vld [vmem:[%s389 + $0x50] sm:$0xff]
        %v462 = vld [vmem:[%s389 + $0x58] sm:$0xff]
        %v463 = vld [vmem:[%s389 + $0x60] sm:$0xff]
        %v464 = vld [vmem:[%s389 + $0x68] sm:$0xff]
        %v465 = vld [vmem:[%s389 + $0x70] sm:$0xff]
        %v466 = vld [vmem:[%s389 + $0x78] sm:$0xff]
        %v467 = vld [vmem:[%s389 + $0x80] sm:$0xff]
        %v468 = vld [vmem:[%s389 + $0x88] sm:$0xff]
        %v469 = vld [vmem:[%s389 + $0x90] sm:$0xff]
        %v470 = vld [vmem:[%s389 + $0x98] sm:$0xff]
        %v471 = vld [vmem:[%s389 + $0xa0] sm:$0xff]
        %v472 = vld [vmem:[%s389 + $0xa8] sm:$0xff]
        %v473 = vld [vmem:[%s389 + $0xb0] sm:$0xff]
        %v474 = vld [vmem:[%s389 + $0xb8] sm:$0xff]
        %v475 = vld [vmem:[%s389 + $0xc0] sm:$0xff]
        %v476 = vld [vmem:[%s389 + $0xc8] sm:$0xff]
        %v477 = vld [vmem:[%s389 + $0xd0] sm:$0xff]
        %v478 = vld [vmem:[%s389 + $0xd8] sm:$0xff]
        %v479 = vld [vmem:[%s389 + $0xe0] sm:$0xff]
        %v480 = vld [vmem:[%s389 + $0xe8] sm:$0xff]
        %v481 = vld [vmem:[%s389 + $0xf0] sm:$0xff]
        %v482 = vld [vmem:[%s389 + $0xf8] sm:$0xff]
        %v483 = vld [vmem:[%s389 + $0x100] sm:$0xff]
        %v484 = vld [vmem:[%s389 + $0x108] sm:$0xff]
        %v485 = vld [vmem:[%s389 + $0x110] sm:$0xff]
        %v486 = vld [vmem:[%s389 + $0x118] sm:$0xff]
        %v487 = vld [vmem:[%s389 + $0x120] sm:$0xff]
        %v488 = vld [vmem:[%s389 + $0x128] sm:$0xff]
        %v489 = vld [vmem:[%s389 + $0x130] sm:$0xff]
        %v490 = vld [vmem:[%s389 + $0x138] sm:$0xff]
        %v491 = vld [vmem:[%s389 + $0x140] sm:$0xff]
        %v492 = vld [vmem:[%s389 + $0x148] sm:$0xff]
        %v493 = vld [vmem:[%s389 + $0x150] sm:$0xff]
        %v494 = vld [vmem:[%s389 + $0x158] sm:$0xff]
        %v495 = vld [vmem:[%s389 + $0x160] sm:$0xff]
        %v496 = vld [vmem:[%s389 + $0x168] sm:$0xff]
        %v497 = vld [vmem:[%s389 + $0x170] sm:$0xff]
        %v498 = vld [vmem:[%s389 + $0x178] sm:$0xff]
        %v499 = vld [vmem:[%s389 + $0x180] sm:$0xff]
        %v500 = vld [vmem:[%s389 + $0x188] sm:$0xff]
        %v501 = vld [vmem:[%s389 + $0x190] sm:$0xff]
        %v502 = vld [vmem:[%s389 + $0x198] sm:$0xff]
        %v503 = vld [vmem:[%s389 + $0x1a0] sm:$0xff]
        %v504 = vld [vmem:[%s389 + $0x1a8] sm:$0xff]
        %v505 = vld [vmem:[%s389 + $0x1b0] sm:$0xff]
        %v506 = vld [vmem:[%s389 + $0x1b8] sm:$0xff]
        %v507 = vld [vmem:[%s389 + $0x1c0] sm:$0xff]
        %v508 = vld [vmem:[%s389 + $0x1c8] sm:$0xff]
        %v509 = vld [vmem:[%s389 + $0x1d0] sm:$0xff]
        %v510 = vld [vmem:[%s389 + $0x1d8] sm:$0xff]
        %v511 = vld [vmem:[%s389 + $0x1e0] sm:$0xff]
        %v512 = vld [vmem:[%s389 + $0x1e8] sm:$0xff]
        %v513 = vld [vmem:[%s389 + $0x1f0] sm:$0xff]
        %v514 = vld [vmem:[%s389 + $0x1f8] sm:$0xff]
        %v515 = vld [vmem:[%s429] sm:$0xff]
        %v516 = vld [vmem:[%s429 + $0x8] sm:$0xff]
        %v519 = vperm.slane %v515, 0
        %v520 = vperm.slane %v515, 1
        %v521 = vperm.slane %v515, 2
        %v522 = vperm.slane %v515, 3
        %v523 = vperm.slane %v515, 4
        %v524 = vperm.slane %v515, 5
        %v525 = vperm.slane %v515, 6
        %v526 = vperm.slane %v515, 7
        %v527 = vperm.slane %v516, 0
        %v528 = vperm.slane %v516, 1
        %v529 = vperm.slane %v516, 2
        %v530 = vperm.slane %v516, 3
        %v531 = vperm.slane %v516, 4
        %v532 = vperm.slane %v516, 5
        %v533 = vperm.slane %v516, 6
        %v534 = vperm.slane %v516, 7
        %v615 = vunpack.c.l.b16 %v451
        %v616 = vunpack.c.h.b16 %v451
        %v617 = vunpack.c.l.b16 %v452
        %v618 = vunpack.c.h.b16 %v452
        %v619 = vunpack.c.l.b16 %v453
        %v620 = vunpack.c.h.b16 %v453
        %v621 = vunpack.c.l.b16 %v454
        %v622 = vunpack.c.h.b16 %v454
        %v623 = vunpack.c.l.b16 %v455
        %v624 = vunpack.c.h.b16 %v455
        %v625 = vunpack.c.l.b16 %v456
        %v626 = vunpack.c.h.b16 %v456
        %v627 = vunpack.c.l.b16 %v457
        %v628 = vunpack.c.h.b16 %v457
        %v629 = vunpack.c.l.b16 %v458
        %v630 = vunpack.c.h.b16 %v458
        %v631 = vunpack.c.l.b16 %v459
        %v632 = vunpack.c.h.b16 %v459
        %v633 = vunpack.c.l.b16 %v460
        %v634 = vunpack.c.h.b16 %v460
        %v635 = vunpack.c.l.b16 %v461
        %v636 = vunpack.c.h.b16 %v461
        %v637 = vunpack.c.l.b16 %v462
        %v638 = vunpack.c.h.b16 %v462
        %v639 = vunpack.c.l.b16 %v463
        %v640 = vunpack.c.h.b16 %v463
        %v641 = vunpack.c.l.b16 %v464
        %v642 = vunpack.c.h.b16 %v464
        %v643 = vunpack.c.l.b16 %v465
        %v644 = vunpack.c.h.b16 %v465
        %v645 = vunpack.c.l.b16 %v466
        %v646 = vunpack.c.h.b16 %v466
        %v647 = vunpack.c.l.b16 %v467
        %v648 = vunpack.c.h.b16 %v467
        %v649 = vunpack.c.l.b16 %v468
        %v650 = vunpack.c.h.b16 %v468
        %v651 = vunpack.c.l.b16 %v469
        %v652 = vunpack.c.h.b16 %v469
        %v653 = vunpack.c.l.b16 %v470
        %v654 = vunpack.c.h.b16 %v470
        %v655 = vunpack.c.l.b16 %v471
        %v656 = vunpack.c.h.b16 %v471
        %v657 = vunpack.c.l.b16 %v472
        %v658 = vunpack.c.h.b16 %v472
        %v659 = vunpack.c.l.b16 %v473
        %v660 = vunpack.c.h.b16 %v473
        %v661 = vunpack.c.l.b16 %v474
        %v662 = vunpack.c.h.b16 %v474
        %v663 = vunpack.c.l.b16 %v475
        %v664 = vunpack.c.h.b16 %v475
        %v665 = vunpack.c.l.b16 %v476
        %v666 = vunpack.c.h.b16 %v476
        %v667 = vunpack.c.l.b16 %v477
        %v668 = vunpack.c.h.b16 %v477
        %v669 = vunpack.c.l.b16 %v478
        %v670 = vunpack.c.h.b16 %v478
        %v671 = vunpack.c.l.b16 %v479
        %v672 = vunpack.c.h.b16 %v479
        %v673 = vunpack.c.l.b16 %v480
        %v674 = vunpack.c.h.b16 %v480
        %v675 = vunpack.c.l.b16 %v481
        %v676 = vunpack.c.h.b16 %v481
        %v677 = vunpack.c.l.b16 %v482
        %v678 = vunpack.c.h.b16 %v482
        %v679 = vunpack.c.l.b16 %v483
        %v680 = vunpack.c.h.b16 %v483
        %v681 = vunpack.c.l.b16 %v484
        %v682 = vunpack.c.h.b16 %v484
        %v683 = vunpack.c.l.b16 %v485
        %v684 = vunpack.c.h.b16 %v485
        %v685 = vunpack.c.l.b16 %v486
        %v686 = vunpack.c.h.b16 %v486
        %v687 = vunpack.c.l.b16 %v487
        %v688 = vunpack.c.h.b16 %v487
        %v689 = vunpack.c.l.b16 %v488
        %v690 = vunpack.c.h.b16 %v488
        %v691 = vunpack.c.l.b16 %v489
        %v692 = vunpack.c.h.b16 %v489
        %v693 = vunpack.c.l.b16 %v490
        %v694 = vunpack.c.h.b16 %v490
        %v695 = vunpack.c.l.b16 %v491
        %v696 = vunpack.c.h.b16 %v491
        %v697 = vunpack.c.l.b16 %v492
        %v698 = vunpack.c.h.b16 %v492
        %v699 = vunpack.c.l.b16 %v493
        %v700 = vunpack.c.h.b16 %v493
        %v701 = vunpack.c.l.b16 %v494
        %v702 = vunpack.c.h.b16 %v494
        %v703 = vunpack.c.l.b16 %v495
        %v704 = vunpack.c.h.b16 %v495
        %v705 = vunpack.c.l.b16 %v496
        %v706 = vunpack.c.h.b16 %v496
        %v707 = vunpack.c.l.b16 %v497
        %v708 = vunpack.c.h.b16 %v497
        %v709 = vunpack.c.l.b16 %v498
        %v710 = vunpack.c.h.b16 %v498
        %v711 = vunpack.c.l.b16 %v499
        %v712 = vunpack.c.h.b16 %v499
        %v713 = vunpack.c.l.b16 %v500
        %v714 = vunpack.c.h.b16 %v500
        %v715 = vunpack.c.l.b16 %v501
        %v716 = vunpack.c.h.b16 %v501
        %v717 = vunpack.c.l.b16 %v502
        %v718 = vunpack.c.h.b16 %v502
        %v719 = vunpack.c.l.b16 %v503
        %v720 = vunpack.c.h.b16 %v503
        %v721 = vunpack.c.l.b16 %v504
        %v722 = vunpack.c.h.b16 %v504
        %v723 = vunpack.c.l.b16 %v505
        %v724 = vunpack.c.h.b16 %v505
        %v725 = vunpack.c.l.b16 %v506
        %v726 = vunpack.c.h.b16 %v506
        %v727 = vunpack.c.l.b16 %v507
        %v728 = vunpack.c.h.b16 %v507
        %v729 = vunpack.c.l.b16 %v508
        %v730 = vunpack.c.h.b16 %v508
        %v731 = vunpack.c.l.b16 %v509
        %v732 = vunpack.c.h.b16 %v509
        %v733 = vunpack.c.l.b16 %v510
        %v734 = vunpack.c.h.b16 %v510
        %v735 = vunpack.c.l.b16 %v511
        %v736 = vunpack.c.h.b16 %v511
        %v737 = vunpack.c.l.b16 %v512
        %v738 = vunpack.c.h.b16 %v512
        %v739 = vunpack.c.l.b16 %v513
        %v740 = vunpack.c.h.b16 %v513
        %v741 = vunpack.c.l.b16 %v514
        %v742 = vunpack.c.h.b16 %v514
        %v743 = vpack.c.b16 %v631, %v615
        %v744 = vpack.c.b16 %v632, %v616
        %v745 = vpack.c.b16 %v633, %v617
        %v746 = vpack.c.b16 %v634, %v618
        %v747 = vpack.c.b16 %v635, %v619
        %v748 = vpack.c.b16 %v636, %v620
        %v749 = vpack.c.b16 %v637, %v621
        %v750 = vpack.c.b16 %v638, %v622
        %v751 = vpack.c.b16 %v639, %v623
        %v752 = vpack.c.b16 %v640, %v624
        %v753 = vpack.c.b16 %v641, %v625
        %v754 = vpack.c.b16 %v642, %v626
        %v755 = vpack.c.b16 %v643, %v627
        %v756 = vpack.c.b16 %v644, %v628
        %v757 = vpack.c.b16 %v645, %v629
        %v758 = vpack.c.b16 %v646, %v630
        %v759 = vpack.c.b16 %v663, %v647
        %v760 = vpack.c.b16 %v664, %v648
        %v761 = vpack.c.b16 %v665, %v649
        %v762 = vpack.c.b16 %v666, %v650
        %v763 = vpack.c.b16 %v667, %v651
        %v764 = vpack.c.b16 %v668, %v652
        %v765 = vpack.c.b16 %v669, %v653
        %v766 = vpack.c.b16 %v670, %v654
        %v767 = vpack.c.b16 %v671, %v655
        %v768 = vpack.c.b16 %v672, %v656
        %v769 = vpack.c.b16 %v673, %v657
        %v770 = vpack.c.b16 %v674, %v658
        %v771 = vpack.c.b16 %v675, %v659
        %v772 = vpack.c.b16 %v676, %v660
        %v773 = vpack.c.b16 %v677, %v661
        %v774 = vpack.c.b16 %v678, %v662
        %v775 = vpack.c.b16 %v695, %v679
        %v776 = vpack.c.b16 %v696, %v680
        %v777 = vpack.c.b16 %v697, %v681
        %v778 = vpack.c.b16 %v698, %v682
        %v779 = vpack.c.b16 %v699, %v683
        %v780 = vpack.c.b16 %v700, %v684
        %v781 = vpack.c.b16 %v701, %v685
        %v782 = vpack.c.b16 %v702, %v686
        %v783 = vpack.c.b16 %v703, %v687
        %v784 = vpack.c.b16 %v704, %v688
        %v785 = vpack.c.b16 %v705, %v689
        %v786 = vpack.c.b16 %v706, %v690
        %v787 = vpack.c.b16 %v707, %v691
        %v788 = vpack.c.b16 %v708, %v692
        %v789 = vpack.c.b16 %v709, %v693
        %v790 = vpack.c.b16 %v710, %v694
        %v791 = vpack.c.b16 %v727, %v711
        %v792 = vpack.c.b16 %v728, %v712
        %v793 = vpack.c.b16 %v729, %v713
        %v794 = vpack.c.b16 %v730, %v714
        %v795 = vpack.c.b16 %v731, %v715
        %v796 = vpack.c.b16 %v732, %v716
        %v797 = vpack.c.b16 %v733, %v717
        %v798 = vpack.c.b16 %v734, %v718
        %v799 = vpack.c.b16 %v735, %v719
        %v800 = vpack.c.b16 %v736, %v720
        %v801 = vpack.c.b16 %v737, %v721
        %v802 = vpack.c.b16 %v738, %v722
        %v803 = vpack.c.b16 %v739, %v723
        %v804 = vpack.c.b16 %v740, %v724
        %v805 = vpack.c.b16 %v741, %v725
        %v806 = vpack.c.b16 %v742, %v726
        %vm871 = vcmask 523264
        %v873 = vsel %vm871, %v450, 0
        %875 = vmatpush.bf16.msra.mxu0 0
        %876 = vmatpush.bf16.msra.mxu0 0
        %877 = vmatpush.bf16.msra.mxu0 0
        %878 = vmatpush.bf16.msra.mxu0 0
        %879 = vmatpush.bf16.msra.mxu0 %v791
        %880 = vmatpush.bf16.msra.mxu0 %v775
        %881 = vmatpush.bf16.msra.mxu0 %v759
        %882 = vmatpush.bf16.msra.mxu0 %v743
        %883 = vmatmul.bf16.gmra.mxu0 %v873
        %v884 = vpop.f32.mrf.mxu0
        %v885 = vadd.f32 %v519, %v884
        %v886 = vpop.f32.mrf.mxu0
        %887 = vdwg.mxu0
        %888 = vmatpush.bf16.msra.mxu0 0
        %889 = vmatpush.bf16.msra.mxu0 0
        %890 = vmatpush.bf16.msra.mxu0 0
        %891 = vmatpush.bf16.msra.mxu0 0
        %892 = vmatpush.bf16.msra.mxu0 %v792
        %893 = vmatpush.bf16.msra.mxu0 %v776
        %894 = vmatpush.bf16.msra.mxu0 %v760
        %895 = vmatpush.bf16.msra.mxu0 %v744
        %896 = vmatmul.bf16.gmra.mxu0 %v873
        %v897 = vpop.f32.mrf.mxu0
        %v898 = vadd.f32 %v520, %v897
        %v899 = vpop.f32.mrf.mxu0
        %900 = vdwg.mxu0
        %901 = vmatpush.bf16.msra.mxu0 0
        %902 = vmatpush.bf16.msra.mxu0 0
        %903 = vmatpush.bf16.msra.mxu0 0
        %904 = vmatpush.bf16.msra.mxu0 0
        %905 = vmatpush.bf16.msra.mxu0 %v793
        %906 = vmatpush.bf16.msra.mxu0 %v777
        %907 = vmatpush.bf16.msra.mxu0 %v761
        %908 = vmatpush.bf16.msra.mxu0 %v745
        %909 = vmatmul.bf16.gmra.mxu0 %v873
        %v910 = vpop.f32.mrf.mxu0
        %v911 = vadd.f32 %v521, %v910
        %v912 = vpop.f32.mrf.mxu0
        %913 = vdwg.mxu0
        %914 = vmatpush.bf16.msra.mxu0 0
        %915 = vmatpush.bf16.msra.mxu0 0
        %916 = vmatpush.bf16.msra.mxu0 0
        %917 = vmatpush.bf16.msra.mxu0 0
        %918 = vmatpush.bf16.msra.mxu0 %v794
        %919 = vmatpush.bf16.msra.mxu0 %v778
        %920 = vmatpush.bf16.msra.mxu0 %v762
        %921 = vmatpush.bf16.msra.mxu0 %v746
        %922 = vmatmul.bf16.gmra.mxu0 %v873
        %v923 = vpop.f32.mrf.mxu0
        %v924 = vadd.f32 %v522, %v923
        %v925 = vpop.f32.mrf.mxu0
        %926 = vdwg.mxu0
        %927 = vmatpush.bf16.msra.mxu0 0
        %928 = vmatpush.bf16.msra.mxu0 0
        %929 = vmatpush.bf16.msra.mxu0 0
        %930 = vmatpush.bf16.msra.mxu0 0
        %931 = vmatpush.bf16.msra.mxu0 %v795
        %932 = vmatpush.bf16.msra.mxu0 %v779
        %933 = vmatpush.bf16.msra.mxu0 %v763
        %934 = vmatpush.bf16.msra.mxu0 %v747
        %935 = vmatmul.bf16.gmra.mxu0 %v873
        %v936 = vpop.f32.mrf.mxu0
        %v937 = vadd.f32 %v523, %v936
        %v938 = vpop.f32.mrf.mxu0
        %939 = vdwg.mxu0
        %940 = vmatpush.bf16.msra.mxu0 0
        %941 = vmatpush.bf16.msra.mxu0 0
        %942 = vmatpush.bf16.msra.mxu0 0
        %943 = vmatpush.bf16.msra.mxu0 0
        %944 = vmatpush.bf16.msra.mxu0 %v796
        %945 = vmatpush.bf16.msra.mxu0 %v780
        %946 = vmatpush.bf16.msra.mxu0 %v764
        %947 = vmatpush.bf16.msra.mxu0 %v748
        %948 = vmatmul.bf16.gmra.mxu0 %v873
        %v949 = vpop.f32.mrf.mxu0
        %v950 = vadd.f32 %v524, %v949
        %v951 = vpop.f32.mrf.mxu0
        %952 = vdwg.mxu0
        %953 = vmatpush.bf16.msra.mxu0 0
        %954 = vmatpush.bf16.msra.mxu0 0
        %955 = vmatpush.bf16.msra.mxu0 0
        %956 = vmatpush.bf16.msra.mxu0 0
        %957 = vmatpush.bf16.msra.mxu0 %v797
        %958 = vmatpush.bf16.msra.mxu0 %v781
        %959 = vmatpush.bf16.msra.mxu0 %v765
        %960 = vmatpush.bf16.msra.mxu0 %v749
        %961 = vmatmul.bf16.gmra.mxu0 %v873
        %v962 = vpop.f32.mrf.mxu0
        %v963 = vadd.f32 %v525, %v962
        %v964 = vpop.f32.mrf.mxu0
        %965 = vdwg.mxu0
        %966 = vmatpush.bf16.msra.mxu0 0
        %967 = vmatpush.bf16.msra.mxu0 0
        %968 = vmatpush.bf16.msra.mxu0 0
        %969 = vmatpush.bf16.msra.mxu0 0
        %970 = vmatpush.bf16.msra.mxu0 %v798
        %971 = vmatpush.bf16.msra.mxu0 %v782
        %972 = vmatpush.bf16.msra.mxu0 %v766
        %973 = vmatpush.bf16.msra.mxu0 %v750
        %974 = vmatmul.bf16.gmra.mxu0 %v873
        %v975 = vpop.f32.mrf.mxu0
        %v976 = vadd.f32 %v526, %v975
        %v977 = vpop.f32.mrf.mxu0
        %978 = vdwg.mxu0
        %979 = vmatpush.bf16.msra.mxu0 0
        %980 = vmatpush.bf16.msra.mxu0 0
        %981 = vmatpush.bf16.msra.mxu0 0
        %982 = vmatpush.bf16.msra.mxu0 0
        %983 = vmatpush.bf16.msra.mxu0 %v799
        %984 = vmatpush.bf16.msra.mxu0 %v783
        %985 = vmatpush.bf16.msra.mxu0 %v767
        %986 = vmatpush.bf16.msra.mxu0 %v751
        %987 = vmatmul.bf16.gmra.mxu0 %v873
        %v988 = vpop.f32.mrf.mxu0
        %v989 = vadd.f32 %v527, %v988
        %v990 = vpop.f32.mrf.mxu0
        %991 = vdwg.mxu0
        %992 = vmatpush.bf16.msra.mxu0 0
        %993 = vmatpush.bf16.msra.mxu0 0
        %994 = vmatpush.bf16.msra.mxu0 0
        %995 = vmatpush.bf16.msra.mxu0 0
        %996 = vmatpush.bf16.msra.mxu0 %v800
        %997 = vmatpush.bf16.msra.mxu0 %v784
        %998 = vmatpush.bf16.msra.mxu0 %v768
        %999 = vmatpush.bf16.msra.mxu0 %v752
        %1000 = vmatmul.bf16.gmra.mxu0 %v873
        %v1001 = vpop.f32.mrf.mxu0
        %v1002 = vadd.f32 %v528, %v1001
        %v1003 = vpop.f32.mrf.mxu0
        %1004 = vdwg.mxu0
        %1005 = vmatpush.bf16.msra.mxu0 0
        %1006 = vmatpush.bf16.msra.mxu0 0
        %1007 = vmatpush.bf16.msra.mxu0 0
        %1008 = vmatpush.bf16.msra.mxu0 0
        %1009 = vmatpush.bf16.msra.mxu0 %v801
        %1010 = vmatpush.bf16.msra.mxu0 %v785
        %1011 = vmatpush.bf16.msra.mxu0 %v769
        %1012 = vmatpush.bf16.msra.mxu0 %v753
        %1013 = vmatmul.bf16.gmra.mxu0 %v873
        %v1014 = vpop.f32.mrf.mxu0
        %v1015 = vadd.f32 %v529, %v1014
        %v1016 = vpop.f32.mrf.mxu0
        %1017 = vdwg.mxu0
        %1018 = vmatpush.bf16.msra.mxu0 0
        %1019 = vmatpush.bf16.msra.mxu0 0
        %1020 = vmatpush.bf16.msra.mxu0 0
        %1021 = vmatpush.bf16.msra.mxu0 0
        %1022 = vmatpush.bf16.msra.mxu0 %v802
        %1023 = vmatpush.bf16.msra.mxu0 %v786
        %1024 = vmatpush.bf16.msra.mxu0 %v770
        %1025 = vmatpush.bf16.msra.mxu0 %v754
        %1026 = vmatmul.bf16.gmra.mxu0 %v873
        %v1027 = vpop.f32.mrf.mxu0
        %v1028 = vadd.f32 %v530, %v1027
        %v1029 = vpop.f32.mrf.mxu0
        %1030 = vdwg.mxu0
        %1031 = vmatpush.bf16.msra.mxu0 0
        %1032 = vmatpush.bf16.msra.mxu0 0
        %1033 = vmatpush.bf16.msra.mxu0 0
        %1034 = vmatpush.bf16.msra.mxu0 0
        %1035 = vmatpush.bf16.msra.mxu0 %v803
        %1036 = vmatpush.bf16.msra.mxu0 %v787
        %1037 = vmatpush.bf16.msra.mxu0 %v771
        %1038 = vmatpush.bf16.msra.mxu0 %v755
        %1039 = vmatmul.bf16.gmra.mxu0 %v873
        %v1040 = vpop.f32.mrf.mxu0
        %v1041 = vadd.f32 %v531, %v1040
        %v1042 = vpop.f32.mrf.mxu0
        %1043 = vdwg.mxu0
        %1044 = vmatpush.bf16.msra.mxu0 0
        %1045 = vmatpush.bf16.msra.mxu0 0
        %1046 = vmatpush.bf16.msra.mxu0 0
        %1047 = vmatpush.bf16.msra.mxu0 0
        %1048 = vmatpush.bf16.msra.mxu0 %v804
        %1049 = vmatpush.bf16.msra.mxu0 %v788
        %1050 = vmatpush.bf16.msra.mxu0 %v772
        %1051 = vmatpush.bf16.msra.mxu0 %v756
        %1052 = vmatmul.bf16.gmra.mxu0 %v873
        %v1053 = vpop.f32.mrf.mxu0
        %v1054 = vadd.f32 %v532, %v1053
        %v1055 = vpop.f32.mrf.mxu0
        %1056 = vdwg.mxu0
        %1057 = vmatpush.bf16.msra.mxu0 0
        %1058 = vmatpush.bf16.msra.mxu0 0
        %1059 = vmatpush.bf16.msra.mxu0 0
        %1060 = vmatpush.bf16.msra.mxu0 0
        %1061 = vmatpush.bf16.msra.mxu0 %v805
        %1062 = vmatpush.bf16.msra.mxu0 %v789
        %1063 = vmatpush.bf16.msra.mxu0 %v773
        %1064 = vmatpush.bf16.msra.mxu0 %v757
        %1065 = vmatmul.bf16.gmra.mxu0 %v873
        %v1066 = vpop.f32.mrf.mxu0
        %v1067 = vadd.f32 %v533, %v1066
        %v1068 = vpop.f32.mrf.mxu0
        %1069 = vdwg.mxu0
        %1070 = vmatpush.bf16.msra.mxu0 0
        %1071 = vmatpush.bf16.msra.mxu0 0
        %1072 = vmatpush.bf16.msra.mxu0 0
        %1073 = vmatpush.bf16.msra.mxu0 0
        %1074 = vmatpush.bf16.msra.mxu0 %v806
        %1075 = vmatpush.bf16.msra.mxu0 %v790
        %1076 = vmatpush.bf16.msra.mxu0 %v774
        %1077 = vmatpush.bf16.msra.mxu0 %v758
        %1078 = vmatmul.bf16.gmra.mxu0 %v873
        %v1079 = vpop.f32.mrf.mxu0
        %v1080 = vadd.f32 %v534, %v1079
        %v1081 = vpop.f32.mrf.mxu0
        %1082 = vdwg.mxu0
        %vm1083 = vcmp.gt.f32.partialorder %v885, 0.0
        %vm1084 = vcmp.gt.f32.partialorder %v898, 0.0
        %vm1085 = vcmp.gt.f32.partialorder %v911, 0.0
        %vm1086 = vcmp.gt.f32.partialorder %v924, 0.0
        %vm1087 = vcmp.gt.f32.partialorder %v937, 0.0
        %vm1088 = vcmp.gt.f32.partialorder %v950, 0.0
        %vm1089 = vcmp.gt.f32.partialorder %v963, 0.0
        %vm1090 = vcmp.gt.f32.partialorder %v976, 0.0
        %vm1091 = vcmp.gt.f32.partialorder %v989, 0.0
        %vm1092 = vcmp.gt.f32.partialorder %v1002, 0.0
        %vm1093 = vcmp.gt.f32.partialorder %v1015, 0.0
        %vm1094 = vcmp.gt.f32.partialorder %v1028, 0.0
        %vm1095 = vcmp.gt.f32.partialorder %v1041, 0.0
        %vm1096 = vcmp.gt.f32.partialorder %v1054, 0.0
        %vm1097 = vcmp.gt.f32.partialorder %v1067, 0.0
        %vm1098 = vcmp.gt.f32.partialorder %v1080, 0.0
        %v1099 = vmul.f32 %v885, 0.01
        %v1100 = vmul.f32 %v898, 0.01
        %v1101 = vmul.f32 %v911, 0.01
        %v1102 = vmul.f32 %v924, 0.01
        %v1103 = vmul.f32 %v937, 0.01
        %v1104 = vmul.f32 %v950, 0.01
        %v1105 = vmul.f32 %v963, 0.01
        %v1106 = vmul.f32 %v976, 0.01
        %v1107 = vmul.f32 %v989, 0.01
        %v1108 = vmul.f32 %v1002, 0.01
        %v1109 = vmul.f32 %v1015, 0.01
        %v1110 = vmul.f32 %v1028, 0.01
        %v1111 = vmul.f32 %v1041, 0.01
        %v1112 = vmul.f32 %v1054, 0.01
        %v1113 = vmul.f32 %v1067, 0.01
        %v1114 = vmul.f32 %v1080, 0.01
        %v1115 = vsel %vm1083, %v885, %v1099
        %v1116 = vsel %vm1084, %v898, %v1100
        %v1117 = vsel %vm1085, %v911, %v1101
        %v1118 = vsel %vm1086, %v924, %v1102
        %v1119 = vsel %vm1087, %v937, %v1103
        %v1120 = vsel %vm1088, %v950, %v1104
        %v1121 = vsel %vm1089, %v963, %v1105
        %v1122 = vsel %vm1090, %v976, %v1106
        %v1123 = vsel %vm1091, %v989, %v1107
        %v1124 = vsel %vm1092, %v1002, %v1108
        %v1125 = vsel %vm1093, %v1015, %v1109
        %v1126 = vsel %vm1094, %v1028, %v1110
        %v1127 = vsel %vm1095, %v1041, %v1111
        %v1128 = vsel %vm1096, %v1054, %v1112
        %v1129 = vsel %vm1097, %v1067, %v1113
        %v1130 = vsel %vm1098, %v1080, %v1114
        %1131 = vst [vmem:[%s424] sm:$0xff] %v1115
        %1132 = vst [vmem:[%s424 + $0x8] sm:$0xff] %v1116
        %1133 = vst [vmem:[%s424 + $0x10] sm:$0xff] %v1117
        %1134 = vst [vmem:[%s424 + $0x18] sm:$0xff] %v1118
        %1135 = vst [vmem:[%s424 + $0x20] sm:$0xff] %v1119
        %1136 = vst [vmem:[%s424 + $0x28] sm:$0xff] %v1120
        %1137 = vst [vmem:[%s424 + $0x30] sm:$0xff] %v1121
        %1138 = vst [vmem:[%s424 + $0x38] sm:$0xff] %v1122
        %1139 = vst [vmem:[%s424 + $0x40] sm:$0xff] %v1123
        %1140 = vst [vmem:[%s424 + $0x48] sm:$0xff] %v1124
        %1141 = vst [vmem:[%s424 + $0x50] sm:$0xff] %v1125
        %1142 = vst [vmem:[%s424 + $0x58] sm:$0xff] %v1126
        %1143 = vst [vmem:[%s424 + $0x60] sm:$0xff] %v1127
        %1144 = vst [vmem:[%s424 + $0x68] sm:$0xff] %v1128
        %1145 = vst [vmem:[%s424 + $0x70] sm:$0xff] %v1129
        %1146 = vst [vmem:[%s424 + $0x78] sm:$0xff] %v1130
        %v1147 = vld [vmem:[#allocation3] sm:$0xff]
        %v1148 = vpack.c.bf16 %v1115, %v1115
        %v1149 = vpack.c.bf16 %v1116, %v1116
        %v1150 = vpack.c.bf16 %v1117, %v1117
        %v1151 = vpack.c.bf16 %v1118, %v1118
        %v1152 = vpack.c.bf16 %v1119, %v1119
        %v1153 = vpack.c.bf16 %v1120, %v1120
        %v1154 = vpack.c.bf16 %v1121, %v1121
        %v1155 = vpack.c.bf16 %v1122, %v1122
        %v1156 = vpack.c.bf16 %v1123, %v1123
        %v1157 = vpack.c.bf16 %v1124, %v1124
        %v1158 = vpack.c.bf16 %v1125, %v1125
        %v1159 = vpack.c.bf16 %v1126, %v1126
        %v1160 = vpack.c.bf16 %v1127, %v1127
        %v1161 = vpack.c.bf16 %v1128, %v1128
        %v1162 = vpack.c.bf16 %v1129, %v1129
        %v1163 = vpack.c.bf16 %v1130, %v1130
        %v1164 = vld [vmem:[%s435] sm:$0xf]
        %v1165 = vld [vmem:[%s435 + $0x4] sm:$0xf]
        %v1166 = vld [vmem:[%s435 + $0x8] sm:$0xf]
        %v1167 = vld [vmem:[%s435 + $0xc] sm:$0xf]
        %v1168 = vld [vmem:[%s435 + $0x10] sm:$0xf]
        %v1169 = vld [vmem:[%s435 + $0x14] sm:$0xf]
        %v1170 = vld [vmem:[%s435 + $0x18] sm:$0xf]
        %v1171 = vld [vmem:[%s435 + $0x1c] sm:$0xf]
        %v1172 = vld [vmem:[%s435 + $0x20] sm:$0xf]
        %v1173 = vld [vmem:[%s435 + $0x24] sm:$0xf]
        %v1174 = vld [vmem:[%s435 + $0x28] sm:$0xf]
        %v1175 = vld [vmem:[%s435 + $0x2c] sm:$0xf]
        %v1176 = vld [vmem:[%s435 + $0x30] sm:$0xf]
        %v1177 = vld [vmem:[%s435 + $0x34] sm:$0xf]
        %v1178 = vld [vmem:[%s435 + $0x38] sm:$0xf]
        %v1179 = vld [vmem:[%s435 + $0x3c] sm:$0xf]
        %v1180 = vld [vmem:[%s435 + $0x40] sm:$0xf]
        %v1181 = vld [vmem:[%s435 + $0x44] sm:$0xf]
        %v1182 = vld [vmem:[%s435 + $0x48] sm:$0xf]
        %v1183 = vld [vmem:[%s435 + $0x4c] sm:$0xf]
        %v1184 = vld [vmem:[%s435 + $0x50] sm:$0xf]
        %v1185 = vld [vmem:[%s435 + $0x54] sm:$0xf]
        %v1186 = vld [vmem:[%s435 + $0x58] sm:$0xf]
        %v1187 = vld [vmem:[%s435 + $0x5c] sm:$0xf]
        %v1188 = vld [vmem:[%s435 + $0x60] sm:$0xf]
        %v1189 = vld [vmem:[%s435 + $0x64] sm:$0xf]
        %v1190 = vld [vmem:[%s435 + $0x68] sm:$0xf]
        %v1191 = vld [vmem:[%s435 + $0x6c] sm:$0xf]
        %v1192 = vld [vmem:[%s435 + $0x70] sm:$0xf]
        %v1193 = vld [vmem:[%s435 + $0x74] sm:$0xf]
        %v1194 = vld [vmem:[%s435 + $0x78] sm:$0xf]
        %v1195 = vld [vmem:[%s435 + $0x7c] sm:$0xf]
        %v1196 = vld [vmem:[%s435 + $0x80] sm:$0xf]
        %v1197 = vld [vmem:[%s435 + $0x84] sm:$0xf]
        %v1198 = vld [vmem:[%s435 + $0x88] sm:$0xf]
        %v1199 = vld [vmem:[%s435 + $0x8c] sm:$0xf]
        %v1200 = vld [vmem:[%s435 + $0x90] sm:$0xf]
        %v1201 = vld [vmem:[%s435 + $0x94] sm:$0xf]
        %v1202 = vld [vmem:[%s435 + $0x98] sm:$0xf]
        %v1203 = vld [vmem:[%s435 + $0x9c] sm:$0xf]
        %v1204 = vld [vmem:[%s435 + $0xa0] sm:$0xf]
        %v1205 = vld [vmem:[%s435 + $0xa4] sm:$0xf]
        %v1206 = vld [vmem:[%s435 + $0xa8] sm:$0xf]
        %v1207 = vld [vmem:[%s435 + $0xac] sm:$0xf]
        %v1208 = vld [vmem:[%s435 + $0xb0] sm:$0xf]
        %v1209 = vld [vmem:[%s435 + $0xb4] sm:$0xf]
        %v1210 = vld [vmem:[%s435 + $0xb8] sm:$0xf]
        %v1211 = vld [vmem:[%s435 + $0xbc] sm:$0xf]
        %v1212 = vld [vmem:[%s435 + $0xc0] sm:$0xf]
        %v1213 = vld [vmem:[%s435 + $0xc4] sm:$0xf]
        %v1214 = vld [vmem:[%s435 + $0xc8] sm:$0xf]
        %v1215 = vld [vmem:[%s435 + $0xcc] sm:$0xf]
        %v1216 = vld [vmem:[%s435 + $0xd0] sm:$0xf]
        %v1217 = vld [vmem:[%s435 + $0xd4] sm:$0xf]
        %v1218 = vld [vmem:[%s435 + $0xd8] sm:$0xf]
        %v1219 = vld [vmem:[%s435 + $0xdc] sm:$0xf]
        %v1220 = vld [vmem:[%s435 + $0xe0] sm:$0xf]
        %v1221 = vld [vmem:[%s435 + $0xe4] sm:$0xf]
        %v1222 = vld [vmem:[%s435 + $0xe8] sm:$0xf]
        %v1223 = vld [vmem:[%s435 + $0xec] sm:$0xf]
        %v1224 = vld [vmem:[%s435 + $0xf0] sm:$0xf]
        %v1225 = vld [vmem:[%s435 + $0xf4] sm:$0xf]
        %v1226 = vld [vmem:[%s435 + $0xf8] sm:$0xf]
        %v1227 = vld [vmem:[%s435 + $0xfc] sm:$0xf]
        %v1228 = vld [vmem:[%s435 + $0x100] sm:$0xf]
        %v1229 = vld [vmem:[%s435 + $0x104] sm:$0xf]
        %v1230 = vld [vmem:[%s435 + $0x108] sm:$0xf]
        %v1231 = vld [vmem:[%s435 + $0x10c] sm:$0xf]
        %v1232 = vld [vmem:[%s435 + $0x110] sm:$0xf]
        %v1233 = vld [vmem:[%s435 + $0x114] sm:$0xf]
        %v1234 = vld [vmem:[%s435 + $0x118] sm:$0xf]
        %v1235 = vld [vmem:[%s435 + $0x11c] sm:$0xf]
        %v1236 = vld [vmem:[%s435 + $0x120] sm:$0xf]
        %v1237 = vld [vmem:[%s435 + $0x124] sm:$0xf]
        %v1238 = vld [vmem:[%s435 + $0x128] sm:$0xf]
        %v1239 = vld [vmem:[%s435 + $0x12c] sm:$0xf]
        %v1240 = vld [vmem:[%s435 + $0x130] sm:$0xf]
        %v1241 = vld [vmem:[%s435 + $0x134] sm:$0xf]
        %v1242 = vld [vmem:[%s435 + $0x138] sm:$0xf]
        %v1243 = vld [vmem:[%s435 + $0x13c] sm:$0xf]
        %v1244 = vld [vmem:[%s435 + $0x140] sm:$0xf]
        %v1245 = vld [vmem:[%s435 + $0x144] sm:$0xf]
        %v1246 = vld [vmem:[%s435 + $0x148] sm:$0xf]
        %v1247 = vld [vmem:[%s435 + $0x14c] sm:$0xf]
        %v1248 = vld [vmem:[%s435 + $0x150] sm:$0xf]
        %v1249 = vld [vmem:[%s435 + $0x154] sm:$0xf]
        %v1250 = vld [vmem:[%s435 + $0x158] sm:$0xf]
        %v1251 = vld [vmem:[%s435 + $0x15c] sm:$0xf]
        %v1252 = vld [vmem:[%s435 + $0x160] sm:$0xf]
        %v1253 = vld [vmem:[%s435 + $0x164] sm:$0xf]
        %v1254 = vld [vmem:[%s435 + $0x168] sm:$0xf]
        %v1255 = vld [vmem:[%s435 + $0x16c] sm:$0xf]
        %v1256 = vld [vmem:[%s435 + $0x170] sm:$0xf]
        %v1257 = vld [vmem:[%s435 + $0x174] sm:$0xf]
        %v1258 = vld [vmem:[%s435 + $0x178] sm:$0xf]
        %v1259 = vld [vmem:[%s435 + $0x17c] sm:$0xf]
        %v1260 = vld [vmem:[%s435 + $0x180] sm:$0xf]
        %v1261 = vld [vmem:[%s435 + $0x184] sm:$0xf]
        %v1262 = vld [vmem:[%s435 + $0x188] sm:$0xf]
        %v1263 = vld [vmem:[%s435 + $0x18c] sm:$0xf]
        %v1264 = vld [vmem:[%s435 + $0x190] sm:$0xf]
        %v1265 = vld [vmem:[%s435 + $0x194] sm:$0xf]
        %v1266 = vld [vmem:[%s435 + $0x198] sm:$0xf]
        %v1267 = vld [vmem:[%s435 + $0x19c] sm:$0xf]
        %v1268 = vld [vmem:[%s435 + $0x1a0] sm:$0xf]
        %v1269 = vld [vmem:[%s435 + $0x1a4] sm:$0xf]
        %v1270 = vld [vmem:[%s435 + $0x1a8] sm:$0xf]
        %v1271 = vld [vmem:[%s435 + $0x1ac] sm:$0xf]
        %v1272 = vld [vmem:[%s435 + $0x1b0] sm:$0xf]
        %v1273 = vld [vmem:[%s435 + $0x1b4] sm:$0xf]
        %v1274 = vld [vmem:[%s435 + $0x1b8] sm:$0xf]
        %v1275 = vld [vmem:[%s435 + $0x1bc] sm:$0xf]
        %v1276 = vld [vmem:[%s435 + $0x1c0] sm:$0xf]
        %v1277 = vld [vmem:[%s435 + $0x1c4] sm:$0xf]
        %v1278 = vld [vmem:[%s435 + $0x1c8] sm:$0xf]
        %v1279 = vld [vmem:[%s435 + $0x1cc] sm:$0xf]
        %v1280 = vld [vmem:[%s435 + $0x1d0] sm:$0xf]
        %v1281 = vld [vmem:[%s435 + $0x1d4] sm:$0xf]
        %v1282 = vld [vmem:[%s435 + $0x1d8] sm:$0xf]
        %v1283 = vld [vmem:[%s435 + $0x1dc] sm:$0xf]
        %v1284 = vld [vmem:[%s435 + $0x1e0] sm:$0xf]
        %v1285 = vld [vmem:[%s435 + $0x1e4] sm:$0xf]
        %v1286 = vld [vmem:[%s435 + $0x1e8] sm:$0xf]
        %v1287 = vld [vmem:[%s435 + $0x1ec] sm:$0xf]
        %v1288 = vld [vmem:[%s435 + $0x1f0] sm:$0xf]
        %v1289 = vld [vmem:[%s435 + $0x1f4] sm:$0xf]
        %v1290 = vld [vmem:[%s435 + $0x1f8] sm:$0xf]
        %v1291 = vld [vmem:[%s435 + $0x1fc] sm:$0xf]
        %v1292 = vld [vmem:[%s435 + $0x200] sm:$0xf]
        %v1293 = vld [vmem:[%s435 + $0x204] sm:$0xf]
        %v1294 = vld [vmem:[%s435 + $0x208] sm:$0xf]
        %v1295 = vld [vmem:[%s435 + $0x20c] sm:$0xf]
        %v1296 = vld [vmem:[%s435 + $0x210] sm:$0xf]
        %v1297 = vld [vmem:[%s435 + $0x214] sm:$0xf]
        %v1298 = vld [vmem:[%s435 + $0x218] sm:$0xf]
        %v1299 = vld [vmem:[%s435 + $0x21c] sm:$0xf]
        %v1300 = vld [vmem:[%s435 + $0x220] sm:$0xf]
        %v1301 = vld [vmem:[%s435 + $0x224] sm:$0xf]
        %v1302 = vld [vmem:[%s435 + $0x228] sm:$0xf]
        %v1303 = vld [vmem:[%s435 + $0x22c] sm:$0xf]
        %v1304 = vld [vmem:[%s435 + $0x230] sm:$0xf]
        %v1305 = vld [vmem:[%s435 + $0x234] sm:$0xf]
        %v1306 = vld [vmem:[%s435 + $0x238] sm:$0xf]
        %v1307 = vld [vmem:[%s435 + $0x23c] sm:$0xf]
        %v1308 = vld [vmem:[%s435 + $0x240] sm:$0xf]
        %v1309 = vld [vmem:[%s435 + $0x244] sm:$0xf]
        %v1310 = vld [vmem:[%s435 + $0x248] sm:$0xf]
        %v1311 = vld [vmem:[%s435 + $0x24c] sm:$0xf]
        %v1312 = vld [vmem:[%s435 + $0x250] sm:$0xf]
        %v1313 = vld [vmem:[%s435 + $0x254] sm:$0xf]
        %v1314 = vld [vmem:[%s435 + $0x258] sm:$0xf]
        %v1315 = vld [vmem:[%s435 + $0x25c] sm:$0xf]
        %v1316 = vld [vmem:[%s435 + $0x260] sm:$0xf]
        %v1317 = vld [vmem:[%s435 + $0x264] sm:$0xf]
        %v1318 = vld [vmem:[%s435 + $0x268] sm:$0xf]
        %v1319 = vld [vmem:[%s435 + $0x26c] sm:$0xf]
        %v1320 = vld [vmem:[%s435 + $0x270] sm:$0xf]
        %v1321 = vld [vmem:[%s435 + $0x274] sm:$0xf]
        %v1322 = vld [vmem:[%s435 + $0x278] sm:$0xf]
        %v1323 = vld [vmem:[%s435 + $0x27c] sm:$0xf]
        %v1324 = vld [vmem:[%s435 + $0x280] sm:$0xf]
        %v1325 = vld [vmem:[%s435 + $0x284] sm:$0xf]
        %v1326 = vld [vmem:[%s435 + $0x288] sm:$0xf]
        %v1327 = vld [vmem:[%s435 + $0x28c] sm:$0xf]
        %v1328 = vld [vmem:[%s435 + $0x290] sm:$0xf]
        %v1329 = vld [vmem:[%s435 + $0x294] sm:$0xf]
        %v1330 = vld [vmem:[%s435 + $0x298] sm:$0xf]
        %v1331 = vld [vmem:[%s435 + $0x29c] sm:$0xf]
        %v1332 = vld [vmem:[%s435 + $0x2a0] sm:$0xf]
        %v1333 = vld [vmem:[%s435 + $0x2a4] sm:$0xf]
        %v1334 = vld [vmem:[%s435 + $0x2a8] sm:$0xf]
        %v1335 = vld [vmem:[%s435 + $0x2ac] sm:$0xf]
        %v1336 = vld [vmem:[%s435 + $0x2b0] sm:$0xf]
        %v1337 = vld [vmem:[%s435 + $0x2b4] sm:$0xf]
        %v1338 = vld [vmem:[%s435 + $0x2b8] sm:$0xf]
        %v1339 = vld [vmem:[%s435 + $0x2bc] sm:$0xf]
        %v1340 = vld [vmem:[%s435 + $0x2c0] sm:$0xf]
        %v1341 = vld [vmem:[%s435 + $0x2c4] sm:$0xf]
        %v1342 = vld [vmem:[%s435 + $0x2c8] sm:$0xf]
        %v1343 = vld [vmem:[%s435 + $0x2cc] sm:$0xf]
        %v1344 = vld [vmem:[%s435 + $0x2d0] sm:$0xf]
        %v1345 = vld [vmem:[%s435 + $0x2d4] sm:$0xf]
        %v1346 = vld [vmem:[%s435 + $0x2d8] sm:$0xf]
        %v1347 = vld [vmem:[%s435 + $0x2dc] sm:$0xf]
        %v1348 = vld [vmem:[%s435 + $0x2e0] sm:$0xf]
        %v1349 = vld [vmem:[%s435 + $0x2e4] sm:$0xf]
        %v1350 = vld [vmem:[%s435 + $0x2e8] sm:$0xf]
        %v1351 = vld [vmem:[%s435 + $0x2ec] sm:$0xf]
        %v1352 = vld [vmem:[%s435 + $0x2f0] sm:$0xf]
        %v1353 = vld [vmem:[%s435 + $0x2f4] sm:$0xf]
        %v1354 = vld [vmem:[%s435 + $0x2f8] sm:$0xf]
        %v1355 = vld [vmem:[%s435 + $0x2fc] sm:$0xf]
        %v1356 = vld [vmem:[%s435 + $0x300] sm:$0xf]
        %v1357 = vld [vmem:[%s435 + $0x304] sm:$0xf]
        %v1358 = vld [vmem:[%s435 + $0x308] sm:$0xf]
        %v1359 = vld [vmem:[%s435 + $0x30c] sm:$0xf]
        %v1360 = vld [vmem:[%s435 + $0x310] sm:$0xf]
        %v1361 = vld [vmem:[%s435 + $0x314] sm:$0xf]
        %v1362 = vld [vmem:[%s435 + $0x318] sm:$0xf]
        %v1363 = vld [vmem:[%s435 + $0x31c] sm:$0xf]
        %v1364 = vld [vmem:[%s435 + $0x320] sm:$0xf]
        %v1365 = vld [vmem:[%s435 + $0x324] sm:$0xf]
        %v1366 = vld [vmem:[%s435 + $0x328] sm:$0xf]
        %v1367 = vld [vmem:[%s435 + $0x32c] sm:$0xf]
        %v1368 = vld [vmem:[%s435 + $0x330] sm:$0xf]
        %v1369 = vld [vmem:[%s435 + $0x334] sm:$0xf]
        %v1370 = vld [vmem:[%s435 + $0x338] sm:$0xf]
        %v1371 = vld [vmem:[%s435 + $0x33c] sm:$0xf]
        %v1372 = vld [vmem:[%s435 + $0x340] sm:$0xf]
        %v1373 = vld [vmem:[%s435 + $0x344] sm:$0xf]
        %v1374 = vld [vmem:[%s435 + $0x348] sm:$0xf]
        %v1375 = vld [vmem:[%s435 + $0x34c] sm:$0xf]
        %v1376 = vld [vmem:[%s435 + $0x350] sm:$0xf]
        %v1377 = vld [vmem:[%s435 + $0x354] sm:$0xf]
        %v1378 = vld [vmem:[%s435 + $0x358] sm:$0xf]
        %v1379 = vld [vmem:[%s435 + $0x35c] sm:$0xf]
        %v1380 = vld [vmem:[%s435 + $0x360] sm:$0xf]
        %v1381 = vld [vmem:[%s435 + $0x364] sm:$0xf]
        %v1382 = vld [vmem:[%s435 + $0x368] sm:$0xf]
        %v1383 = vld [vmem:[%s435 + $0x36c] sm:$0xf]
        %v1384 = vld [vmem:[%s435 + $0x370] sm:$0xf]
        %v1385 = vld [vmem:[%s435 + $0x374] sm:$0xf]
        %v1386 = vld [vmem:[%s435 + $0x378] sm:$0xf]
        %v1387 = vld [vmem:[%s435 + $0x37c] sm:$0xf]
        %v1388 = vld [vmem:[%s435 + $0x380] sm:$0xf]
        %v1389 = vld [vmem:[%s435 + $0x384] sm:$0xf]
        %v1390 = vld [vmem:[%s435 + $0x388] sm:$0xf]
        %v1391 = vld [vmem:[%s435 + $0x38c] sm:$0xf]
        %v1392 = vld [vmem:[%s435 + $0x390] sm:$0xf]
        %v1393 = vld [vmem:[%s435 + $0x394] sm:$0xf]
        %v1394 = vld [vmem:[%s435 + $0x398] sm:$0xf]
        %v1395 = vld [vmem:[%s435 + $0x39c] sm:$0xf]
        %v1396 = vld [vmem:[%s435 + $0x3a0] sm:$0xf]
        %v1397 = vld [vmem:[%s435 + $0x3a4] sm:$0xf]
        %v1398 = vld [vmem:[%s435 + $0x3a8] sm:$0xf]
        %v1399 = vld [vmem:[%s435 + $0x3ac] sm:$0xf]
        %v1400 = vld [vmem:[%s435 + $0x3b0] sm:$0xf]
        %v1401 = vld [vmem:[%s435 + $0x3b4] sm:$0xf]
        %v1402 = vld [vmem:[%s435 + $0x3b8] sm:$0xf]
        %v1403 = vld [vmem:[%s435 + $0x3bc] sm:$0xf]
        %v1404 = vld [vmem:[%s435 + $0x3c0] sm:$0xf]
        %v1405 = vld [vmem:[%s435 + $0x3c4] sm:$0xf]
        %v1406 = vld [vmem:[%s435 + $0x3c8] sm:$0xf]
        %v1407 = vld [vmem:[%s435 + $0x3cc] sm:$0xf]
        %v1408 = vld [vmem:[%s435 + $0x3d0] sm:$0xf]
        %v1409 = vld [vmem:[%s435 + $0x3d4] sm:$0xf]
        %v1410 = vld [vmem:[%s435 + $0x3d8] sm:$0xf]
        %v1411 = vld [vmem:[%s435 + $0x3dc] sm:$0xf]
        %v1412 = vld [vmem:[%s435 + $0x3e0] sm:$0xf]
        %v1413 = vld [vmem:[%s435 + $0x3e4] sm:$0xf]
        %v1414 = vld [vmem:[%s435 + $0x3e8] sm:$0xf]
        %v1415 = vld [vmem:[%s435 + $0x3ec] sm:$0xf]
        %v1416 = vld [vmem:[%s435 + $0x3f0] sm:$0xf]
        %v1417 = vld [vmem:[%s435 + $0x3f4] sm:$0xf]
        %v1418 = vld [vmem:[%s435 + $0x3f8] sm:$0xf]
        %v1419 = vld [vmem:[%s435 + $0x3fc] sm:$0xf]
        %v1676 = vunpack.c.l.b16 %v1164
        %v1677 = vunpack.c.l.b16 %v1165
        %v1678 = vunpack.c.l.b16 %v1166
        %v1679 = vunpack.c.l.b16 %v1167
        %v1680 = vunpack.c.l.b16 %v1168
        %v1681 = vunpack.c.l.b16 %v1169
        %v1682 = vunpack.c.l.b16 %v1170
        %v1683 = vunpack.c.l.b16 %v1171
        %v1684 = vunpack.c.l.b16 %v1172
        %v1685 = vunpack.c.l.b16 %v1173
        %v1686 = vunpack.c.l.b16 %v1174
        %v1687 = vunpack.c.l.b16 %v1175
        %v1688 = vunpack.c.l.b16 %v1176
        %v1689 = vunpack.c.l.b16 %v1177
        %v1690 = vunpack.c.l.b16 %v1178
        %v1691 = vunpack.c.l.b16 %v1179
        %v1692 = vunpack.c.l.b16 %v1180
        %v1693 = vunpack.c.l.b16 %v1181
        %v1694 = vunpack.c.l.b16 %v1182
        %v1695 = vunpack.c.l.b16 %v1183
        %v1696 = vunpack.c.l.b16 %v1184
        %v1697 = vunpack.c.l.b16 %v1185
        %v1698 = vunpack.c.l.b16 %v1186
        %v1699 = vunpack.c.l.b16 %v1187
        %v1700 = vunpack.c.l.b16 %v1188
        %v1701 = vunpack.c.l.b16 %v1189
        %v1702 = vunpack.c.l.b16 %v1190
        %v1703 = vunpack.c.l.b16 %v1191
        %v1704 = vunpack.c.l.b16 %v1192
        %v1705 = vunpack.c.l.b16 %v1193
        %v1706 = vunpack.c.l.b16 %v1194
        %v1707 = vunpack.c.l.b16 %v1195
        %v1708 = vunpack.c.l.b16 %v1196
        %v1709 = vunpack.c.l.b16 %v1197
        %v1710 = vunpack.c.l.b16 %v1198
        %v1711 = vunpack.c.l.b16 %v1199
        %v1712 = vunpack.c.l.b16 %v1200
        %v1713 = vunpack.c.l.b16 %v1201
        %v1714 = vunpack.c.l.b16 %v1202
        %v1715 = vunpack.c.l.b16 %v1203
        %v1716 = vunpack.c.l.b16 %v1204
        %v1717 = vunpack.c.l.b16 %v1205
        %v1718 = vunpack.c.l.b16 %v1206
        %v1719 = vunpack.c.l.b16 %v1207
        %v1720 = vunpack.c.l.b16 %v1208
        %v1721 = vunpack.c.l.b16 %v1209
        %v1722 = vunpack.c.l.b16 %v1210
        %v1723 = vunpack.c.l.b16 %v1211
        %v1724 = vunpack.c.l.b16 %v1212
        %v1725 = vunpack.c.l.b16 %v1213
        %v1726 = vunpack.c.l.b16 %v1214
        %v1727 = vunpack.c.l.b16 %v1215
        %v1728 = vunpack.c.l.b16 %v1216
        %v1729 = vunpack.c.l.b16 %v1217
        %v1730 = vunpack.c.l.b16 %v1218
        %v1731 = vunpack.c.l.b16 %v1219
        %v1732 = vunpack.c.l.b16 %v1220
        %v1733 = vunpack.c.l.b16 %v1221
        %v1734 = vunpack.c.l.b16 %v1222
        %v1735 = vunpack.c.l.b16 %v1223
        %v1736 = vunpack.c.l.b16 %v1224
        %v1737 = vunpack.c.l.b16 %v1225
        %v1738 = vunpack.c.l.b16 %v1226
        %v1739 = vunpack.c.l.b16 %v1227
        %v1740 = vunpack.c.l.b16 %v1228
        %v1741 = vunpack.c.l.b16 %v1229
        %v1742 = vunpack.c.l.b16 %v1230
        %v1743 = vunpack.c.l.b16 %v1231
        %v1744 = vunpack.c.l.b16 %v1232
        %v1745 = vunpack.c.l.b16 %v1233
        %v1746 = vunpack.c.l.b16 %v1234
        %v1747 = vunpack.c.l.b16 %v1235
        %v1748 = vunpack.c.l.b16 %v1236
        %v1749 = vunpack.c.l.b16 %v1237
        %v1750 = vunpack.c.l.b16 %v1238
        %v1751 = vunpack.c.l.b16 %v1239
        %v1752 = vunpack.c.l.b16 %v1240
        %v1753 = vunpack.c.l.b16 %v1241
        %v1754 = vunpack.c.l.b16 %v1242
        %v1755 = vunpack.c.l.b16 %v1243
        %v1756 = vunpack.c.l.b16 %v1244
        %v1757 = vunpack.c.l.b16 %v1245
        %v1758 = vunpack.c.l.b16 %v1246
        %v1759 = vunpack.c.l.b16 %v1247
        %v1760 = vunpack.c.l.b16 %v1248
        %v1761 = vunpack.c.l.b16 %v1249
        %v1762 = vunpack.c.l.b16 %v1250
        %v1763 = vunpack.c.l.b16 %v1251
        %v1764 = vunpack.c.l.b16 %v1252
        %v1765 = vunpack.c.l.b16 %v1253
        %v1766 = vunpack.c.l.b16 %v1254
        %v1767 = vunpack.c.l.b16 %v1255
        %v1768 = vunpack.c.l.b16 %v1256
        %v1769 = vunpack.c.l.b16 %v1257
        %v1770 = vunpack.c.l.b16 %v1258
        %v1771 = vunpack.c.l.b16 %v1259
        %v1772 = vunpack.c.l.b16 %v1260
        %v1773 = vunpack.c.l.b16 %v1261
        %v1774 = vunpack.c.l.b16 %v1262
        %v1775 = vunpack.c.l.b16 %v1263
        %v1776 = vunpack.c.l.b16 %v1264
        %v1777 = vunpack.c.l.b16 %v1265
        %v1778 = vunpack.c.l.b16 %v1266
        %v1779 = vunpack.c.l.b16 %v1267
        %v1780 = vunpack.c.l.b16 %v1268
        %v1781 = vunpack.c.l.b16 %v1269
        %v1782 = vunpack.c.l.b16 %v1270
        %v1783 = vunpack.c.l.b16 %v1271
        %v1784 = vunpack.c.l.b16 %v1272
        %v1785 = vunpack.c.l.b16 %v1273
        %v1786 = vunpack.c.l.b16 %v1274
        %v1787 = vunpack.c.l.b16 %v1275
        %v1788 = vunpack.c.l.b16 %v1276
        %v1789 = vunpack.c.l.b16 %v1277
        %v1790 = vunpack.c.l.b16 %v1278
        %v1791 = vunpack.c.l.b16 %v1279
        %v1792 = vunpack.c.l.b16 %v1280
        %v1793 = vunpack.c.l.b16 %v1281
        %v1794 = vunpack.c.l.b16 %v1282
        %v1795 = vunpack.c.l.b16 %v1283
        %v1796 = vunpack.c.l.b16 %v1284
        %v1797 = vunpack.c.l.b16 %v1285
        %v1798 = vunpack.c.l.b16 %v1286
        %v1799 = vunpack.c.l.b16 %v1287
        %v1800 = vunpack.c.l.b16 %v1288
        %v1801 = vunpack.c.l.b16 %v1289
        %v1802 = vunpack.c.l.b16 %v1290
        %v1803 = vunpack.c.l.b16 %v1291
        %v1804 = vunpack.c.l.b16 %v1292
        %v1805 = vunpack.c.l.b16 %v1293
        %v1806 = vunpack.c.l.b16 %v1294
        %v1807 = vunpack.c.l.b16 %v1295
        %v1808 = vunpack.c.l.b16 %v1296
        %v1809 = vunpack.c.l.b16 %v1297
        %v1810 = vunpack.c.l.b16 %v1298
        %v1811 = vunpack.c.l.b16 %v1299
        %v1812 = vunpack.c.l.b16 %v1300
        %v1813 = vunpack.c.l.b16 %v1301
        %v1814 = vunpack.c.l.b16 %v1302
        %v1815 = vunpack.c.l.b16 %v1303
        %v1816 = vunpack.c.l.b16 %v1304
        %v1817 = vunpack.c.l.b16 %v1305
        %v1818 = vunpack.c.l.b16 %v1306
        %v1819 = vunpack.c.l.b16 %v1307
        %v1820 = vunpack.c.l.b16 %v1308
        %v1821 = vunpack.c.l.b16 %v1309
        %v1822 = vunpack.c.l.b16 %v1310
        %v1823 = vunpack.c.l.b16 %v1311
        %v1824 = vunpack.c.l.b16 %v1312
        %v1825 = vunpack.c.l.b16 %v1313
        %v1826 = vunpack.c.l.b16 %v1314
        %v1827 = vunpack.c.l.b16 %v1315
        %v1828 = vunpack.c.l.b16 %v1316
        %v1829 = vunpack.c.l.b16 %v1317
        %v1830 = vunpack.c.l.b16 %v1318
        %v1831 = vunpack.c.l.b16 %v1319
        %v1832 = vunpack.c.l.b16 %v1320
        %v1833 = vunpack.c.l.b16 %v1321
        %v1834 = vunpack.c.l.b16 %v1322
        %v1835 = vunpack.c.l.b16 %v1323
        %v1836 = vunpack.c.l.b16 %v1324
        %v1837 = vunpack.c.l.b16 %v1325
        %v1838 = vunpack.c.l.b16 %v1326
        %v1839 = vunpack.c.l.b16 %v1327
        %v1840 = vunpack.c.l.b16 %v1328
        %v1841 = vunpack.c.l.b16 %v1329
        %v1842 = vunpack.c.l.b16 %v1330
        %v1843 = vunpack.c.l.b16 %v1331
        %v1844 = vunpack.c.l.b16 %v1332
        %v1845 = vunpack.c.l.b16 %v1333
        %v1846 = vunpack.c.l.b16 %v1334
        %v1847 = vunpack.c.l.b16 %v1335
        %v1848 = vunpack.c.l.b16 %v1336
        %v1849 = vunpack.c.l.b16 %v1337
        %v1850 = vunpack.c.l.b16 %v1338
        %v1851 = vunpack.c.l.b16 %v1339
        %v1852 = vunpack.c.l.b16 %v1340
        %v1853 = vunpack.c.l.b16 %v1341
        %v1854 = vunpack.c.l.b16 %v1342
        %v1855 = vunpack.c.l.b16 %v1343
        %v1856 = vunpack.c.l.b16 %v1344
        %v1857 = vunpack.c.l.b16 %v1345
        %v1858 = vunpack.c.l.b16 %v1346
        %v1859 = vunpack.c.l.b16 %v1347
        %v1860 = vunpack.c.l.b16 %v1348
        %v1861 = vunpack.c.l.b16 %v1349
        %v1862 = vunpack.c.l.b16 %v1350
        %v1863 = vunpack.c.l.b16 %v1351
        %v1864 = vunpack.c.l.b16 %v1352
        %v1865 = vunpack.c.l.b16 %v1353
        %v1866 = vunpack.c.l.b16 %v1354
        %v1867 = vunpack.c.l.b16 %v1355
        %v1868 = vunpack.c.l.b16 %v1356
        %v1869 = vunpack.c.l.b16 %v1357
        %v1870 = vunpack.c.l.b16 %v1358
        %v1871 = vunpack.c.l.b16 %v1359
        %v1872 = vunpack.c.l.b16 %v1360
        %v1873 = vunpack.c.l.b16 %v1361
        %v1874 = vunpack.c.l.b16 %v1362
        %v1875 = vunpack.c.l.b16 %v1363
        %v1876 = vunpack.c.l.b16 %v1364
        %v1877 = vunpack.c.l.b16 %v1365
        %v1878 = vunpack.c.l.b16 %v1366
        %v1879 = vunpack.c.l.b16 %v1367
        %v1880 = vunpack.c.l.b16 %v1368
        %v1881 = vunpack.c.l.b16 %v1369
        %v1882 = vunpack.c.l.b16 %v1370
        %v1883 = vunpack.c.l.b16 %v1371
        %v1884 = vunpack.c.l.b16 %v1372
        %v1885 = vunpack.c.l.b16 %v1373
        %v1886 = vunpack.c.l.b16 %v1374
        %v1887 = vunpack.c.l.b16 %v1375
        %v1888 = vunpack.c.l.b16 %v1376
        %v1889 = vunpack.c.l.b16 %v1377
        %v1890 = vunpack.c.l.b16 %v1378
        %v1891 = vunpack.c.l.b16 %v1379
        %v1892 = vunpack.c.l.b16 %v1380
        %v1893 = vunpack.c.l.b16 %v1381
        %v1894 = vunpack.c.l.b16 %v1382
        %v1895 = vunpack.c.l.b16 %v1383
        %v1896 = vunpack.c.l.b16 %v1384
        %v1897 = vunpack.c.l.b16 %v1385
        %v1898 = vunpack.c.l.b16 %v1386
        %v1899 = vunpack.c.l.b16 %v1387
        %v1900 = vunpack.c.l.b16 %v1388
        %v1901 = vunpack.c.l.b16 %v1389
        %v1902 = vunpack.c.l.b16 %v1390
        %v1903 = vunpack.c.l.b16 %v1391
        %v1904 = vunpack.c.l.b16 %v1392
        %v1905 = vunpack.c.l.b16 %v1393
        %v1906 = vunpack.c.l.b16 %v1394
        %v1907 = vunpack.c.l.b16 %v1395
        %v1908 = vunpack.c.l.b16 %v1396
        %v1909 = vunpack.c.l.b16 %v1397
        %v1910 = vunpack.c.l.b16 %v1398
        %v1911 = vunpack.c.l.b16 %v1399
        %v1912 = vunpack.c.l.b16 %v1400
        %v1913 = vunpack.c.l.b16 %v1401
        %v1914 = vunpack.c.l.b16 %v1402
        %v1915 = vunpack.c.l.b16 %v1403
        %v1916 = vunpack.c.l.b16 %v1404
        %v1917 = vunpack.c.l.b16 %v1405
        %v1918 = vunpack.c.l.b16 %v1406
        %v1919 = vunpack.c.l.b16 %v1407
        %v1920 = vunpack.c.l.b16 %v1408
        %v1921 = vunpack.c.l.b16 %v1409
        %v1922 = vunpack.c.l.b16 %v1410
        %v1923 = vunpack.c.l.b16 %v1411
        %v1924 = vunpack.c.l.b16 %v1412
        %v1925 = vunpack.c.l.b16 %v1413
        %v1926 = vunpack.c.l.b16 %v1414
        %v1927 = vunpack.c.l.b16 %v1415
        %v1928 = vunpack.c.l.b16 %v1416
        %v1929 = vunpack.c.l.b16 %v1417
        %v1930 = vunpack.c.l.b16 %v1418
        %v1931 = vunpack.c.l.b16 %v1419
        %v1932 = vpack.c.b16 %v1677, %v1676
        %v1933 = vpack.c.b16 %v1679, %v1678
        %v1934 = vpack.c.b16 %v1681, %v1680
        %v1935 = vpack.c.b16 %v1683, %v1682
        %v1936 = vpack.c.b16 %v1685, %v1684
        %v1937 = vpack.c.b16 %v1687, %v1686
        %v1938 = vpack.c.b16 %v1689, %v1688
        %v1939 = vpack.c.b16 %v1691, %v1690
        %v1940 = vpack.c.b16 %v1693, %v1692
        %v1941 = vpack.c.b16 %v1695, %v1694
        %v1942 = vpack.c.b16 %v1697, %v1696
        %v1943 = vpack.c.b16 %v1699, %v1698
        %v1944 = vpack.c.b16 %v1701, %v1700
        %v1945 = vpack.c.b16 %v1703, %v1702
        %v1946 = vpack.c.b16 %v1705, %v1704
        %v1947 = vpack.c.b16 %v1707, %v1706
        %v1948 = vpack.c.b16 %v1709, %v1708
        %v1949 = vpack.c.b16 %v1711, %v1710
        %v1950 = vpack.c.b16 %v1713, %v1712
        %v1951 = vpack.c.b16 %v1715, %v1714
        %v1952 = vpack.c.b16 %v1717, %v1716
        %v1953 = vpack.c.b16 %v1719, %v1718
        %v1954 = vpack.c.b16 %v1721, %v1720
        %v1955 = vpack.c.b16 %v1723, %v1722
        %v1956 = vpack.c.b16 %v1725, %v1724
        %v1957 = vpack.c.b16 %v1727, %v1726
        %v1958 = vpack.c.b16 %v1729, %v1728
        %v1959 = vpack.c.b16 %v1731, %v1730
        %v1960 = vpack.c.b16 %v1733, %v1732
        %v1961 = vpack.c.b16 %v1735, %v1734
        %v1962 = vpack.c.b16 %v1737, %v1736
        %v1963 = vpack.c.b16 %v1739, %v1738
        %v1964 = vpack.c.b16 %v1741, %v1740
        %v1965 = vpack.c.b16 %v1743, %v1742
        %v1966 = vpack.c.b16 %v1745, %v1744
        %v1967 = vpack.c.b16 %v1747, %v1746
        %v1968 = vpack.c.b16 %v1749, %v1748
        %v1969 = vpack.c.b16 %v1751, %v1750
        %v1970 = vpack.c.b16 %v1753, %v1752
        %v1971 = vpack.c.b16 %v1755, %v1754
        %v1972 = vpack.c.b16 %v1757, %v1756
        %v1973 = vpack.c.b16 %v1759, %v1758
        %v1974 = vpack.c.b16 %v1761, %v1760
        %v1975 = vpack.c.b16 %v1763, %v1762
        %v1976 = vpack.c.b16 %v1765, %v1764
        %v1977 = vpack.c.b16 %v1767, %v1766
        %v1978 = vpack.c.b16 %v1769, %v1768
        %v1979 = vpack.c.b16 %v1771, %v1770
        %v1980 = vpack.c.b16 %v1773, %v1772
        %v1981 = vpack.c.b16 %v1775, %v1774
        %v1982 = vpack.c.b16 %v1777, %v1776
        %v1983 = vpack.c.b16 %v1779, %v1778
        %v1984 = vpack.c.b16 %v1781, %v1780
        %v1985 = vpack.c.b16 %v1783, %v1782
        %v1986 = vpack.c.b16 %v1785, %v1784
        %v1987 = vpack.c.b16 %v1787, %v1786
        %v1988 = vpack.c.b16 %v1789, %v1788
        %v1989 = vpack.c.b16 %v1791, %v1790
        %v1990 = vpack.c.b16 %v1793, %v1792
        %v1991 = vpack.c.b16 %v1795, %v1794
        %v1992 = vpack.c.b16 %v1797, %v1796
        %v1993 = vpack.c.b16 %v1799, %v1798
        %v1994 = vpack.c.b16 %v1801, %v1800
        %v1995 = vpack.c.b16 %v1803, %v1802
        %v1996 = vpack.c.b16 %v1805, %v1804
        %v1997 = vpack.c.b16 %v1807, %v1806
        %v1998 = vpack.c.b16 %v1809, %v1808
        %v1999 = vpack.c.b16 %v1811, %v1810
        %v2000 = vpack.c.b16 %v1813, %v1812
        %v2001 = vpack.c.b16 %v1815, %v1814
        %v2002 = vpack.c.b16 %v1817, %v1816
        %v2003 = vpack.c.b16 %v1819, %v1818
        %v2004 = vpack.c.b16 %v1821, %v1820
        %v2005 = vpack.c.b16 %v1823, %v1822
        %v2006 = vpack.c.b16 %v1825, %v1824
        %v2007 = vpack.c.b16 %v1827, %v1826
        %v2008 = vpack.c.b16 %v1829, %v1828
        %v2009 = vpack.c.b16 %v1831, %v1830
        %v2010 = vpack.c.b16 %v1833, %v1832
        %v2011 = vpack.c.b16 %v1835, %v1834
        %v2012 = vpack.c.b16 %v1837, %v1836
        %v2013 = vpack.c.b16 %v1839, %v1838
        %v2014 = vpack.c.b16 %v1841, %v1840
        %v2015 = vpack.c.b16 %v1843, %v1842
        %v2016 = vpack.c.b16 %v1845, %v1844
        %v2017 = vpack.c.b16 %v1847, %v1846
        %v2018 = vpack.c.b16 %v1849, %v1848
        %v2019 = vpack.c.b16 %v1851, %v1850
        %v2020 = vpack.c.b16 %v1853, %v1852
        %v2021 = vpack.c.b16 %v1855, %v1854
        %v2022 = vpack.c.b16 %v1857, %v1856
        %v2023 = vpack.c.b16 %v1859, %v1858
        %v2024 = vpack.c.b16 %v1861, %v1860
        %v2025 = vpack.c.b16 %v1863, %v1862
        %v2026 = vpack.c.b16 %v1865, %v1864
        %v2027 = vpack.c.b16 %v1867, %v1866
        %v2028 = vpack.c.b16 %v1869, %v1868
        %v2029 = vpack.c.b16 %v1871, %v1870
        %v2030 = vpack.c.b16 %v1873, %v1872
        %v2031 = vpack.c.b16 %v1875, %v1874
        %v2032 = vpack.c.b16 %v1877, %v1876
        %v2033 = vpack.c.b16 %v1879, %v1878
        %v2034 = vpack.c.b16 %v1881, %v1880
        %v2035 = vpack.c.b16 %v1883, %v1882
        %v2036 = vpack.c.b16 %v1885, %v1884
        %v2037 = vpack.c.b16 %v1887, %v1886
        %v2038 = vpack.c.b16 %v1889, %v1888
        %v2039 = vpack.c.b16 %v1891, %v1890
        %v2040 = vpack.c.b16 %v1893, %v1892
        %v2041 = vpack.c.b16 %v1895, %v1894
        %v2042 = vpack.c.b16 %v1897, %v1896
        %v2043 = vpack.c.b16 %v1899, %v1898
        %v2044 = vpack.c.b16 %v1901, %v1900
        %v2045 = vpack.c.b16 %v1903, %v1902
        %v2046 = vpack.c.b16 %v1905, %v1904
        %v2047 = vpack.c.b16 %v1907, %v1906
        %v2048 = vpack.c.b16 %v1909, %v1908
        %v2049 = vpack.c.b16 %v1911, %v1910
        %v2050 = vpack.c.b16 %v1913, %v1912
        %v2051 = vpack.c.b16 %v1915, %v1914
        %v2052 = vpack.c.b16 %v1917, %v1916
        %v2053 = vpack.c.b16 %v1919, %v1918
        %v2054 = vpack.c.b16 %v1921, %v1920
        %v2055 = vpack.c.b16 %v1923, %v1922
        %v2056 = vpack.c.b16 %v1925, %v1924
        %v2057 = vpack.c.b16 %v1927, %v1926
        %v2058 = vpack.c.b16 %v1929, %v1928
        %v2059 = vpack.c.b16 %v1931, %v1930
        %2188 = vmatpush.bf16.msra.mxu0 %v1939
        %2189 = vmatpush.bf16.msra.mxu0 %v1938
        %2190 = vmatpush.bf16.msra.mxu0 %v1937
        %2191 = vmatpush.bf16.msra.mxu0 %v1936
        %2192 = vmatpush.bf16.msra.mxu0 %v1935
        %2193 = vmatpush.bf16.msra.mxu0 %v1934
        %2194 = vmatpush.bf16.msra.mxu0 %v1933
        %2195 = vmatpush.bf16.msra.mxu0 %v1932
        %2196 = vmatmul.bf16.gmra.mxu0 %v1148
        %v2197 = vpop.f32.mrf.mxu0
        %v2198 = vadd.f32 0.0, %v2197
        %v2199 = vpop.f32.mrf.mxu0
        %2200 = vdwg.mxu0
        %2201 = vmatpush.bf16.msra.mxu0 %v1947
        %2202 = vmatpush.bf16.msra.mxu0 %v1946
        %2203 = vmatpush.bf16.msra.mxu0 %v1945
        %2204 = vmatpush.bf16.msra.mxu0 %v1944
        %2205 = vmatpush.bf16.msra.mxu0 %v1943
        %2206 = vmatpush.bf16.msra.mxu0 %v1942
        %2207 = vmatpush.bf16.msra.mxu0 %v1941
        %2208 = vmatpush.bf16.msra.mxu0 %v1940
        %2209 = vmatmul.bf16.gmra.mxu0 %v1149
        %v2210 = vpop.f32.mrf.mxu0
        %v2211 = vadd.f32 %v2198, %v2210
        %v2212 = vpop.f32.mrf.mxu0
        %2213 = vdwg.mxu0
        %2214 = vmatpush.bf16.msra.mxu0 %v1955
        %2215 = vmatpush.bf16.msra.mxu0 %v1954
        %2216 = vmatpush.bf16.msra.mxu0 %v1953
        %2217 = vmatpush.bf16.msra.mxu0 %v1952
        %2218 = vmatpush.bf16.msra.mxu0 %v1951
        %2219 = vmatpush.bf16.msra.mxu0 %v1950
        %2220 = vmatpush.bf16.msra.mxu0 %v1949
        %2221 = vmatpush.bf16.msra.mxu0 %v1948
        %2222 = vmatmul.bf16.gmra.mxu0 %v1150
        %v2223 = vpop.f32.mrf.mxu0
        %v2224 = vadd.f32 %v2211, %v2223
        %v2225 = vpop.f32.mrf.mxu0
        %2226 = vdwg.mxu0
        %2227 = vmatpush.bf16.msra.mxu0 %v1963
        %2228 = vmatpush.bf16.msra.mxu0 %v1962
        %2229 = vmatpush.bf16.msra.mxu0 %v1961
        %2230 = vmatpush.bf16.msra.mxu0 %v1960
        %2231 = vmatpush.bf16.msra.mxu0 %v1959
        %2232 = vmatpush.bf16.msra.mxu0 %v1958
        %2233 = vmatpush.bf16.msra.mxu0 %v1957
        %2234 = vmatpush.bf16.msra.mxu0 %v1956
        %2235 = vmatmul.bf16.gmra.mxu0 %v1151
        %v2236 = vpop.f32.mrf.mxu0
        %v2237 = vadd.f32 %v2224, %v2236
        %v2238 = vpop.f32.mrf.mxu0
        %2239 = vdwg.mxu0
        %2240 = vmatpush.bf16.msra.mxu0 %v1971
        %2241 = vmatpush.bf16.msra.mxu0 %v1970
        %2242 = vmatpush.bf16.msra.mxu0 %v1969
        %2243 = vmatpush.bf16.msra.mxu0 %v1968
        %2244 = vmatpush.bf16.msra.mxu0 %v1967
        %2245 = vmatpush.bf16.msra.mxu0 %v1966
        %2246 = vmatpush.bf16.msra.mxu0 %v1965
        %2247 = vmatpush.bf16.msra.mxu0 %v1964
        %2248 = vmatmul.bf16.gmra.mxu0 %v1152
        %v2249 = vpop.f32.mrf.mxu0
        %v2250 = vadd.f32 %v2237, %v2249
        %v2251 = vpop.f32.mrf.mxu0
        %2252 = vdwg.mxu0
        %2253 = vmatpush.bf16.msra.mxu0 %v1979
        %2254 = vmatpush.bf16.msra.mxu0 %v1978
        %2255 = vmatpush.bf16.msra.mxu0 %v1977
        %2256 = vmatpush.bf16.msra.mxu0 %v1976
        %2257 = vmatpush.bf16.msra.mxu0 %v1975
        %2258 = vmatpush.bf16.msra.mxu0 %v1974
        %2259 = vmatpush.bf16.msra.mxu0 %v1973
        %2260 = vmatpush.bf16.msra.mxu0 %v1972
        %2261 = vmatmul.bf16.gmra.mxu0 %v1153
        %v2262 = vpop.f32.mrf.mxu0
        %v2263 = vadd.f32 %v2250, %v2262
        %v2264 = vpop.f32.mrf.mxu0
        %2265 = vdwg.mxu0
        %2266 = vmatpush.bf16.msra.mxu0 %v1987
        %2267 = vmatpush.bf16.msra.mxu0 %v1986
        %2268 = vmatpush.bf16.msra.mxu0 %v1985
        %2269 = vmatpush.bf16.msra.mxu0 %v1984
        %2270 = vmatpush.bf16.msra.mxu0 %v1983
        %2271 = vmatpush.bf16.msra.mxu0 %v1982
        %2272 = vmatpush.bf16.msra.mxu0 %v1981
        %2273 = vmatpush.bf16.msra.mxu0 %v1980
        %2274 = vmatmul.bf16.gmra.mxu0 %v1154
        %v2275 = vpop.f32.mrf.mxu0
        %v2276 = vadd.f32 %v2263, %v2275
        %v2277 = vpop.f32.mrf.mxu0
        %2278 = vdwg.mxu0
        %2279 = vmatpush.bf16.msra.mxu0 %v1995
        %2280 = vmatpush.bf16.msra.mxu0 %v1994
        %2281 = vmatpush.bf16.msra.mxu0 %v1993
        %2282 = vmatpush.bf16.msra.mxu0 %v1992
        %2283 = vmatpush.bf16.msra.mxu0 %v1991
        %2284 = vmatpush.bf16.msra.mxu0 %v1990
        %2285 = vmatpush.bf16.msra.mxu0 %v1989
        %2286 = vmatpush.bf16.msra.mxu0 %v1988
        %2287 = vmatmul.bf16.gmra.mxu0 %v1155
        %v2288 = vpop.f32.mrf.mxu0
        %v2289 = vadd.f32 %v2276, %v2288
        %v2290 = vpop.f32.mrf.mxu0
        %2291 = vdwg.mxu0
        %2292 = vmatpush.bf16.msra.mxu0 %v2003
        %2293 = vmatpush.bf16.msra.mxu0 %v2002
        %2294 = vmatpush.bf16.msra.mxu0 %v2001
        %2295 = vmatpush.bf16.msra.mxu0 %v2000
        %2296 = vmatpush.bf16.msra.mxu0 %v1999
        %2297 = vmatpush.bf16.msra.mxu0 %v1998
        %2298 = vmatpush.bf16.msra.mxu0 %v1997
        %2299 = vmatpush.bf16.msra.mxu0 %v1996
        %2300 = vmatmul.bf16.gmra.mxu0 %v1156
        %v2301 = vpop.f32.mrf.mxu0
        %v2302 = vadd.f32 %v2289, %v2301
        %v2303 = vpop.f32.mrf.mxu0
        %2304 = vdwg.mxu0
        %2305 = vmatpush.bf16.msra.mxu0 %v2011
        %2306 = vmatpush.bf16.msra.mxu0 %v2010
        %2307 = vmatpush.bf16.msra.mxu0 %v2009
        %2308 = vmatpush.bf16.msra.mxu0 %v2008
        %2309 = vmatpush.bf16.msra.mxu0 %v2007
        %2310 = vmatpush.bf16.msra.mxu0 %v2006
        %2311 = vmatpush.bf16.msra.mxu0 %v2005
        %2312 = vmatpush.bf16.msra.mxu0 %v2004
        %2313 = vmatmul.bf16.gmra.mxu0 %v1157
        %v2314 = vpop.f32.mrf.mxu0
        %v2315 = vadd.f32 %v2302, %v2314
        %v2316 = vpop.f32.mrf.mxu0
        %2317 = vdwg.mxu0
        %2318 = vmatpush.bf16.msra.mxu0 %v2019
        %2319 = vmatpush.bf16.msra.mxu0 %v2018
        %2320 = vmatpush.bf16.msra.mxu0 %v2017
        %2321 = vmatpush.bf16.msra.mxu0 %v2016
        %2322 = vmatpush.bf16.msra.mxu0 %v2015
        %2323 = vmatpush.bf16.msra.mxu0 %v2014
        %2324 = vmatpush.bf16.msra.mxu0 %v2013
        %2325 = vmatpush.bf16.msra.mxu0 %v2012
        %2326 = vmatmul.bf16.gmra.mxu0 %v1158
        %v2327 = vpop.f32.mrf.mxu0
        %v2328 = vadd.f32 %v2315, %v2327
        %v2329 = vpop.f32.mrf.mxu0
        %2330 = vdwg.mxu0
        %2331 = vmatpush.bf16.msra.mxu0 %v2027
        %2332 = vmatpush.bf16.msra.mxu0 %v2026
        %2333 = vmatpush.bf16.msra.mxu0 %v2025
        %2334 = vmatpush.bf16.msra.mxu0 %v2024
        %2335 = vmatpush.bf16.msra.mxu0 %v2023
        %2336 = vmatpush.bf16.msra.mxu0 %v2022
        %2337 = vmatpush.bf16.msra.mxu0 %v2021
        %2338 = vmatpush.bf16.msra.mxu0 %v2020
        %2339 = vmatmul.bf16.gmra.mxu0 %v1159
        %v2340 = vpop.f32.mrf.mxu0
        %v2341 = vadd.f32 %v2328, %v2340
        %v2342 = vpop.f32.mrf.mxu0
        %2343 = vdwg.mxu0
        %2344 = vmatpush.bf16.msra.mxu0 %v2035
        %2345 = vmatpush.bf16.msra.mxu0 %v2034
        %2346 = vmatpush.bf16.msra.mxu0 %v2033
        %2347 = vmatpush.bf16.msra.mxu0 %v2032
        %2348 = vmatpush.bf16.msra.mxu0 %v2031
        %2349 = vmatpush.bf16.msra.mxu0 %v2030
        %2350 = vmatpush.bf16.msra.mxu0 %v2029
        %2351 = vmatpush.bf16.msra.mxu0 %v2028
        %2352 = vmatmul.bf16.gmra.mxu0 %v1160
        %v2353 = vpop.f32.mrf.mxu0
        %v2354 = vadd.f32 %v2341, %v2353
        %v2355 = vpop.f32.mrf.mxu0
        %2356 = vdwg.mxu0
        %2357 = vmatpush.bf16.msra.mxu0 %v2043
        %2358 = vmatpush.bf16.msra.mxu0 %v2042
        %2359 = vmatpush.bf16.msra.mxu0 %v2041
        %2360 = vmatpush.bf16.msra.mxu0 %v2040
        %2361 = vmatpush.bf16.msra.mxu0 %v2039
        %2362 = vmatpush.bf16.msra.mxu0 %v2038
        %2363 = vmatpush.bf16.msra.mxu0 %v2037
        %2364 = vmatpush.bf16.msra.mxu0 %v2036
        %2365 = vmatmul.bf16.gmra.mxu0 %v1161
        %v2366 = vpop.f32.mrf.mxu0
        %v2367 = vadd.f32 %v2354, %v2366
        %v2368 = vpop.f32.mrf.mxu0
        %2369 = vdwg.mxu0
        %2370 = vmatpush.bf16.msra.mxu0 %v2051
        %2371 = vmatpush.bf16.msra.mxu0 %v2050
        %2372 = vmatpush.bf16.msra.mxu0 %v2049
        %2373 = vmatpush.bf16.msra.mxu0 %v2048
        %2374 = vmatpush.bf16.msra.mxu0 %v2047
        %2375 = vmatpush.bf16.msra.mxu0 %v2046
        %2376 = vmatpush.bf16.msra.mxu0 %v2045
        %2377 = vmatpush.bf16.msra.mxu0 %v2044
        %2378 = vmatmul.bf16.gmra.mxu0 %v1162
        %v2379 = vpop.f32.mrf.mxu0
        %v2380 = vadd.f32 %v2367, %v2379
        %v2381 = vpop.f32.mrf.mxu0
        %2382 = vdwg.mxu0
        %2383 = vmatpush.bf16.msra.mxu0 %v2059
        %2384 = vmatpush.bf16.msra.mxu0 %v2058
        %2385 = vmatpush.bf16.msra.mxu0 %v2057
        %2386 = vmatpush.bf16.msra.mxu0 %v2056
        %2387 = vmatpush.bf16.msra.mxu0 %v2055
        %2388 = vmatpush.bf16.msra.mxu0 %v2054
        %2389 = vmatpush.bf16.msra.mxu0 %v2053
        %2390 = vmatpush.bf16.msra.mxu0 %v2052
        %2391 = vmatmul.bf16.gmra.mxu0 %v1163
        %v2392 = vpop.f32.mrf.mxu0
        %v2393 = vadd.f32 %v2380, %v2392
        %v2394 = vpop.f32.mrf.mxu0
        %2395 = vdwg.mxu0
        %v2396 = vadd.f32 %v1147, %v2393
        %vm2397 = vcmask 130048
        %2398 = vst.msk [vmem:[#allocation3] sm:$0xff] %vm2397, %v2396
        %s2399 = sand.u32 %s171, 1
        %s2400 = scalar_lea.sflag [#allocation6], %s2399
        %s2401 = sand.u32 %s171, 1
        %s2402 = smul.addr %s2401, 128
        %s2403 = scalar_lea.vmem [#allocation5], %s2402
        // Predicated region
        $region68: #{tpu_custom_call.1} parent=58 // pred_check
          %p2404 = pneg %p155
        $region69: #{tpu_custom_call.1} parent=58 // pred_check_branch
          %2406 = sbr.rel (%p2404) target = $region71
        $region70: #{tpu_custom_call.1} parent=58 // pred_region
          %2408 = vsyncadd [#allocation4], 0
          %s2410 = sshll.u32 [#allocation3], 4
          %s2411 = int_to_ptr.vmem [resolvable:$true] %s2410
          %s2412 = sshll.u32 %s5, 4
          %s2413 = int_to_ptr.hbm [resolvable:$true] %s2412
          %2415 = dma.vmem_to_hbm [thread:$0]  %s2411, 128, %s2413, [#allocation4]
        $region71: #{tpu_custom_call.1} parent=58 // pred_fallthru
          _
        // Predicated region
        $region72: #{tpu_custom_call.1} parent=58 // pred_check
          %p2416 = pneg %p181
        $region73: #{tpu_custom_call.1} parent=58 // pred_check_branch
          %2418 = sbr.rel (%p2416) target = $region75
        $region74: #{tpu_custom_call.1} parent=58 // pred_region
          %s2419 = smul.u32 16, %s22
          %2421 = vsyncadd %s2400, 0
          %s2422 = smul.addr %s2419, 8
          %s2423 = scalar_lea.hbm %s6, %s2422
          %s2425 = sshll.u32 %s2403, 4
          %s2426 = int_to_ptr.vmem [resolvable:$true] %s2425
          %s2427 = sshll.u32 %s2423, 4
          %s2428 = int_to_ptr.hbm [resolvable:$true] %s2427
          %2430 = dma.vmem_to_hbm [thread:$0]  %s2426, 2048, %s2428, %s2400
        $region75: #{tpu_custom_call.1} parent=58 // pred_fallthru
          _
        // Predicated region
        $region76: #{tpu_custom_call.1} parent=58 // pred_check
          %p2431 = pneg %p155
        $region77: #{tpu_custom_call.1} parent=58 // pred_check_branch
          %2433 = sbr.rel (%p2431) target = $region79
        $region78: #{tpu_custom_call.1} parent=58 // pred_region
          %2435 = dma.done [#allocation4], 128
        $region79: #{tpu_custom_call.1} parent=58 // pred_fallthru
          _
      $region59: #{tpu_custom_call.1} parent=5 // pred_fallthru
        _
      %p2436 = scmp.le.s32.totalorder 2, %s17
      // Predicated region
      $region80: #{tpu_custom_call.1} parent=5 // pred_check
        %p2437 = pneg %p2436
      $region81: #{tpu_custom_call.1} parent=5 // pred_check_branch
        %2439 = sbr.rel (%p2437) target = $region83
      $region82: #{tpu_custom_call.1} parent=5 // pred_region
        %s2440 = ssub.s32 %s17, 2
        // Predicated region
        $region84: #{tpu_custom_call.1} parent=82 // pred_check
          %p2441 = pneg %p187
        $region85: #{tpu_custom_call.1} parent=82 // pred_check_branch
          %2443 = sbr.rel (%p2441) target = $region87
        $region86: #{tpu_custom_call.1} parent=82 // pred_region
          %s2444 = sand.u32 %s172, 1
          %s2445 = scalar_lea.sflag [#allocation6], %s2444
          %s2446 = sand.u32 %s172, 1
          %s2447 = smul.addr %s2446, 128
          %s2448 = scalar_lea.vmem [#allocation5], %s2447
          %2450 = dma.done %s2445, 2048
        $region87: #{tpu_custom_call.1} parent=82 // pred_fallthru
          _
      $region83: #{tpu_custom_call.1} parent=5 // pred_fallthru
        _
    $region6: #{tpu_custom_call.1} parent=1 // loop_footer
      %s21 = sadd.s32 1, %s17
    $region7: #{tpu_custom_call.1} parent=1 // loop_footer_branch
      %16 = sbr.rel target = $region3
    $region8: #{tpu_custom_call.1} parent=1 // loop_exit
      _
    %2451 = vsyncpa [#allocation4], 1
    %s2452 = scalar_lea.sflag [#allocation4], 1
    %2453 = vsyncpa %s2452, 1
    %2454 = vsyncpa [#allocation6], 1
    %s2455 = scalar_lea.sflag [#allocation6], 1
    %2456 = vsyncpa %s2455, 1

</llo_original>
